<compile_context>
chip_gen: v5e
topology: v5e:2x2
jax: 0.10.0
libtpu: 0.0.40
codegen_flags: <defaults>
</compile_context>

<pallas_src>
import functools

import jax
import jax.numpy as jnp
from jax.experimental import pallas as pl
from jax.experimental.pallas import tpu as pltpu

EPS = 1e-5


def _round_up(x, m):
    return (x + m - 1) // m * m


def _cdiv(a, b):
    return -(-a // b)


# ---------------------------------------------------------------------------
# Hardware-aware budgets (best effort; safe fallbacks)
# ---------------------------------------------------------------------------
@functools.lru_cache(maxsize=None)
def _vmem_capacity_bytes():
    try:
        cap = int(pltpu.get_tpu_info().vmem_capacity_bytes)
        if cap > 0:
            return cap
    except Exception:
        pass
    try:
        kind = jax.devices()[0].device_kind.lower()
        if "v7" in kind:
            return 64 * 1024 * 1024
    except Exception:
        pass
    return 128 * 1024 * 1024


@functools.lru_cache(maxsize=None)
def _vmem_limit():
    # ~48 MiB on 128 MiB parts (v5e/v6e), ~38 MiB on 64 MiB-per-TC parts (v7x).
    return int(min(48 * 1024 * 1024, _vmem_capacity_bytes() * 3 // 5))


@functools.lru_cache(maxsize=None)
def _tile_budget():
    return _vmem_limit() // 2


@functools.lru_cache(maxsize=None)
def _is_v5_or_older():
    try:
        kind = jax.devices()[0].device_kind.lower()
        return any(v in kind for v in ("v2", "v3", "v4", "v5"))
    except Exception:
        return False


# ---------------------------------------------------------------------------
# Pallas kernels
# ---------------------------------------------------------------------------
def _mm_bias_kernel(x_ref, w_ref, b_ref, o_ref, *, relu):
    """out = x @ w_folded + bias, optional ReLU (1x1 conv + folded BN)."""
    acc = jnp.dot(x_ref[...], w_ref[...], preferred_element_type=jnp.float32)
    out = acc + b_ref[...]
    if relu:
        out = jnp.maximum(out, 0.0)
    o_ref[...] = out.astype(o_ref.dtype)


def _mm_bias_add_relu_kernel(x_ref, w_ref, b_ref, r_ref, o_ref):
    """out = relu(x @ w_folded + bias + residual) (final 1x1 conv + BN fused)."""
    acc = jnp.dot(x_ref[...], w_ref[...], preferred_element_type=jnp.float32)
    out = acc + b_ref[...] + r_ref[...].astype(jnp.float32)
    o_ref[...] = jnp.maximum(out, 0.0).astype(o_ref.dtype)


def _conv12_kernel(x_ref, m_ref, w1_ref, b1_ref, w2_ref, b2_ref, o_ref,
                   y1_buf, acc_ref, *, stride, Wps, tile_l, win):
    """Fused conv1(1x1)+BN+ReLU and conv2(3x3, pad=1)+BN+ReLU over one row tile.

    x_ref : (s*s, rows_pad, Cin)   phase-decomposed, zero-padded input (one image)
    m_ref : (s*s, rows_pad, 1)     validity mask (0 on padding rows/cols), f32
    w1_ref: (Cin, Cmid)            folded conv1 weight
    b1_ref: (1, Cmid)              folded conv1 bias (f32)
    w2_ref: (9, Cmid, Cmid)        folded per-tap conv2 weights
    b2_ref: (1, Cmid)              folded conv2 bias (f32)
    o_ref : (1, tile_l, Cmid)      output rows [base, base+tile_l) in flat plane space
    y1_buf: (s*s, win, Cmid)       scratch: conv1 activations on the halo window
    acc_ref:(tile_l, Cmid) f32     scratch accumulator for the nine taps
    """
    s = stride
    base = pl.multiple_of(pl.program_id(1) * tile_l, 8)

    # conv1 on the halo window, one matmul per phase plane; the mask restores the
    # zero border that conv1's bias + ReLU would otherwise destroy.
    for p in range(s * s):
        xw = x_ref[p, pl.ds(base, win), :]
        y = jnp.dot(xw, w1_ref[...], preferred_element_type=jnp.float32)
        y = jnp.maximum(y + b1_ref[...], 0.0) * m_ref[p, pl.ds(base, win), :]
        y1_buf[p] = y.astype(y1_buf.dtype)

    # 3x3 taps as statically shifted matmuls accumulated into the VMEM scratch.
    # (Some tap offsets are not 8-aligned; the realign copies are cheap vs the dots.)
    for kh in range(3):
        for kw in range(3):
            p = (kh % s) * s + (kw % s)
            off = (kh // s) * Wps + (kw // s)
            d = jnp.dot(y1_buf[p, off:off + tile_l, :], w2_ref[kh * 3 + kw],
                        preferred_element_type=jnp.float32)
            if kh == 0 and kw == 0:
                acc_ref[...] = d
            else:
                acc_ref[...] += d

    o_ref[0] = jnp.maximum(acc_ref[...] + b2_ref[...], 0.0).astype(o_ref.dtype)


# ---------------------------------------------------------------------------
# Wrappers (tiling decisions + layout plumbing)
# ---------------------------------------------------------------------------
def _choose_tiles(M, K, N, itemsize):
    """Pick (tm, tn) for the 1x1-conv matmuls from a VMEM budget."""
    if (not _is_v5_or_older()) and N % 256 == 0 and N > 256:
        tn = 256                       # 256-wide MXU on v6e/v7x
    elif N % 128 == 0 and N > 128:
        tn = 128                       # native MXU width (and v5e preference)
    else:
        tn = N                         # callers pad N to a multiple of 128
    # Per M-row bytes: double-buffered x/out/residual tiles plus the full f32
    # (tm, tn) dot temporary produced before the epilogue.
    per_row = itemsize * 2 * (K + 2 * tn) + 4 * tn
    fixed = itemsize * 2 * (K * tn + tn)
    avail = max(_tile_budget() - fixed, per_row * 128)
    tm = max(128, min(2048, (avail // per_row) // 128 * 128))
    m128 = _round_up(M, 128)
    tm = min(tm, m128)
    # Only force a second M step when the N axis has a single tile; otherwise it just
    # doubles weight re-DMA traffic and megacore/2-TC can split on N instead.
    if N // tn < 2 and m128 // tm < 2 and m128 >= 256:
        tm = _round_up(m128 // 2, 128)
    return tm, tn


def matmul_bn(x2d, w_folded, bias, *, relu, residual=None,
              compute_dtype=jnp.bfloat16):
    """Fused x @ w_folded + bias (+residual) (+ReLU); BN already folded into w/bias."""
    M, K = x2d.shape
    Kw, Np = w_folded.shape
    assert K == Kw and Np % 128 == 0

    xk = x2d.astype(compute_dtype)
    b2 = bias.astype(jnp.float32).reshape(1, Np)
    rk = residual

    itemsize = jnp.dtype(compute_dtype).itemsize
    tm, tn = _choose_tiles(M, K, Np, itemsize)
    Mp = _round_up(M, tm)
    if Mp != M:
        xk = jnp.pad(xk, ((0, Mp - M), (0, 0)))
        if rk is not None:
            rk = jnp.pad(rk, ((0, Mp - M), (0, 0)))
    grid = (Mp // tm, Np // tn)

    in_specs = [
        pl.BlockSpec((tm, K), lambda i, j: (i, 0)),
        pl.BlockSpec((K, tn), lambda i, j: (0, j)),
        pl.BlockSpec((1, tn), lambda i, j: (0, j)),
    ]
    args = [xk, w_folded, b2]
    if rk is not None:
        in_specs.append(pl.BlockSpec((tm, tn), lambda i, j: (i, j)))
        args.append(rk)
        kernel = _mm_bias_add_relu_kernel
    else:
        kernel = functools.partial(_mm_bias_kernel, relu=relu)

    out = pl.pallas_call(
        kernel,
        out_shape=jax.ShapeDtypeStruct((Mp, Np), compute_dtype),
        grid_spec=pltpu.PrefetchScalarGridSpec(
            num_scalar_prefetch=0,
            grid=grid,
            in_specs=in_specs,
            out_specs=pl.BlockSpec((tm, tn), lambda i, j: (i, j)),
        ),
        compiler_params=pltpu.CompilerParams(
            dimension_semantics=("parallel", "parallel"),
            vmem_limit_bytes=_vmem_limit(),
        ),
    )(*args)
    return out[:M] if Mp != M else out


def conv1_conv3x3_bn_relu(x_nhwc, w1f, b1f, w2f, b2f, *, stride,
                          compute_dtype=jnp.bfloat16):
    """relu(bn2(conv3x3(relu(bn1(conv1x1(x))), stride=stride, pad=1))) fused.

    w1f: (Cin, Cmid) folded+padded conv1 weight; b1f: (Cmid,) f32
    w2f: (9, Cmid, Cmid) folded+padded per-tap conv2 weights; b2f: (Cmid,) f32
    Returns (N, Ho, Wo, Cmid) in compute_dtype (Cmid includes lane padding).
    """
    N, H, W, Cin = x_nhwc.shape
    Cmid = w1f.shape[1]
    s = stride
    assert s in (1, 2)
    Ho = (H + 2 - 3) // s + 1
    Wo = (W + 2 - 3) // s + 1
    Hp = _round_up(H + 2, s)
    Wp = _round_up(W + 2, s)
    Hps, Wps = Hp // s, Wp // s
    span = (2 // s) * (Wps + 1)          # largest tap offset in flat plane rows

    # Row tiling: ~512 flat rows per step, >=2 total grid steps even at batch 1.
    L_need = Ho * Wps
    n_lt = max(2 if N == 1 else 1, _cdiv(L_need, 512))
    tile_l = _round_up(_cdiv(L_need, n_lt), 8)
    n_lt = _cdiv(L_need, tile_l)
    L_pad = n_lt * tile_l
    win = _round_up(tile_l + span, 8)
    rows_pad = _round_up(max(Hps * Wps, (n_lt - 1) * tile_l + win), 8)

    # Zero-padded input (and a border-validity mask) decomposed into stride phases so
    # that each 3x3 tap is a static row shift of a flat plane (~1x traffic, no im2col).
    xp = jnp.pad(x_nhwc.astype(compute_dtype),
                 ((0, 0), (1, Hp - H - 1), (1, Wp - W - 1), (0, 0)))
    mask = jnp.zeros((1, Hp, Wp, 1), jnp.float32).at[:, 1:H + 1, 1:W + 1, :].set(1.0)

    def phase_flat(arr):                 # (B, Hp, Wp, C) -> (B, s*s, rows_pad, C)
        planes = [arr[:, a::s, b::s, :] for a in range(s) for b in range(s)]
        ph = jnp.stack(planes, axis=1).reshape(arr.shape[0], s * s,
                                               Hps * Wps, arr.shape[-1])
        return jnp.pad(ph, ((0, 0), (0, 0), (0, rows_pad - Hps * Wps), (0, 0)))

    ph_x = phase_flat(xp).reshape(N * s * s, rows_pad, Cin)
    ph_m = phase_flat(mask)[0]           # (s*s, rows_pad, 1)

    kernel = functools.partial(_conv12_kernel, stride=s, Wps=Wps,
                               tile_l=tile_l, win=win)
    out = pl.pallas_call(
        kernel,
        out_shape=jax.ShapeDtypeStruct((N, L_pad, Cmid), compute_dtype),
        grid_spec=pltpu.PrefetchScalarGridSpec(
            num_scalar_prefetch=0,
            grid=(N, n_lt),
            in_specs=[
                pl.BlockSpec((s * s, rows_pad, Cin), lambda n, l: (n, 0, 0)),
                pl.BlockSpec((s * s, rows_pad, 1), lambda n, l: (0, 0, 0)),
                pl.BlockSpec((Cin, Cmid), lambda n, l: (0, 0)),
                pl.BlockSpec((1, Cmid), lambda n, l: (0, 0)),
                pl.BlockSpec((9, Cmid, Cmid), lambda n, l: (0, 0, 0)),
                pl.BlockSpec((1, Cmid), lambda n, l: (0, 0)),
            ],
            out_specs=pl.BlockSpec((1, tile_l, Cmid), lambda n, l: (n, l, 0)),
            scratch_shapes=[
                pltpu.VMEM((s * s, win, Cmid), compute_dtype),
                pltpu.VMEM((tile_l, Cmid), jnp.float32),
            ],
        ),
        compiler_params=pltpu.CompilerParams(
            dimension_semantics=("parallel", "parallel"),
            vmem_limit_bytes=_vmem_limit(),
        ),
    )(ph_x, ph_m, w1f, b1f.reshape(1, Cmid), w2f, b2f.reshape(1, Cmid))

    # Rows o = ho*Wps + wo with wo < Wo are the real outputs (overhang sliced off).
    out = out[:, :Ho * Wps, :].reshape(N, Ho, Wps, Cmid)[:, :, :Wo, :]
    return out


# ---------------------------------------------------------------------------
# BN folding into (padded, lane-dense) weights
# ---------------------------------------------------------------------------
def fold_bn(p):
    scale = p["gamma"] / jnp.sqrt(p["var"] + EPS)
    bias = p["beta"] - p["mean"] * scale
    return scale, bias


def _fold_1x1(w_oihw, bn, cin_pad, cout_pad, dtype):
    scale, bias = fold_bn(bn)
    o, i = w_oihw.shape[:2]
    w = w_oihw[:, :, 0, 0].astype(jnp.float32).T * scale[None, :]      # (I, O)
    wp = jnp.zeros((cin_pad, cout_pad), jnp.float32).at[:i, :o].set(w)
    bp = jnp.zeros((cout_pad,), jnp.float32).at[:o].set(bias)
    return wp.astype(dtype), bp


def _fold_3x3(w_oihw, bn, cin_pad, cout_pad, dtype):
    scale, bias = fold_bn(bn)
    o, i = w_oihw.shape[:2]
    w = jnp.transpose(w_oihw, (2, 3, 1, 0)).astype(jnp.float32) * scale  # (3,3,I,O)
    wp = jnp.zeros((3, 3, cin_pad, cout_pad), jnp.float32).at[:, :, :i, :o].set(w)
    bp = jnp.zeros((cout_pad,), jnp.float32).at[:o].set(bias)
    return wp.reshape(9, cin_pad, cout_pad).astype(dtype), bp


# ---------------------------------------------------------------------------
# Bottleneck forward (inference-mode BatchNorm)
# ---------------------------------------------------------------------------
def bottleneck_forward(x_nchw, params, *, stride, downsampling,
                       compute_dtype=jnp.bfloat16):
    x = jnp.transpose(x_nchw, (0, 2, 3, 1))            # NCHW -> NHWC
    N, H, W, Cin = x.shape
    places = params["w1"].shape[0]
    cout = params["w3"].shape[0]
    cmid = _round_up(places, 128)                       # lane-dense mid channels
    cop = _round_up(cout, 128)                          # lane-dense out channels

    w1f, b1f = _fold_1x1(params["w1"], params["bn1"], Cin, cmid, compute_dtype)
    w2f, b2f = _fold_3x3(params["w2"], params["bn2"], cmid, cmid, compute_dtype)
    w3f, b3f = _fold_1x1(params["w3"], params["bn3"], cmid, cop, compute_dtype)

    # conv1 (1x1+BN+ReLU) fused with conv2 (3x3, stride, pad=1, BN, ReLU)
    y2 = conv1_conv3x3_bn_relu(x, w1f, b1f, w2f, b2f, stride=stride,
                               compute_dtype=compute_dtype)
    _, Ho, Wo, _ = y2.shape

    # --- residual branch ---
    if downsampling:
        wdf, bdf = _fold_1x1(params["wd"], params["bnd"], Cin, cop, compute_dtype)
        # TODO(synk): fold the stride-2 spatial subsample into the downsample kernel's
        # index_map / a strided pl.ds instead of this XLA strided slice.
        xd = x[:, ::stride, ::stride, :].astype(compute_dtype).reshape(N * Ho * Wo, Cin)
        res = matmul_bn(xd, wdf, bdf, relu=False, compute_dtype=compute_dtype)
    else:
        assert Cin == cout and stride == 1, (
            "identity residual requires in_places == places*expansion and stride=1")
        res = x.reshape(N * H * W, Cin)                 # stays f32 (no extra rounding)
        if cop != cout:
            res = jnp.pad(res, ((0, 0), (0, cop - cout)))

    # --- conv3 (1x1) + BN, fused residual add + ReLU ---
    y3 = matmul_bn(y2.reshape(N * Ho * Wo, cmid), w3f, b3f, relu=True,
                   residual=res, compute_dtype=compute_dtype)

    out = y3.reshape(N, Ho, Wo, cop)[:, :, :, :cout]
    return jnp.transpose(out, (0, 3, 1, 2)).astype(x_nchw.dtype)   # NHWC -> NCHW


# ---------------------------------------------------------------------------
# Deterministic parameter init (PyTorch OIHW convention) + pure-JAX reference
# ---------------------------------------------------------------------------
def make_bn(key, c):
    k1, k2, k3, k4 = jax.random.split(key, 4)
    return {
        "gamma": jax.random.uniform(k1, (c,), jnp.float32, 0.5, 1.5),
        "beta": jax.random.normal(k2, (c,), jnp.float32) * 0.1,
        "mean": jax.random.normal(k3, (c,), jnp.float32) * 0.1,
        "var": jax.random.uniform(k4, (c,), jnp.float32, 0.5, 1.5),
    }


def make_params(key, in_places, places, expansion, downsampling):
    keys = jax.random.split(key, 10)
    p = {
        "w1": jax.random.normal(keys[0], (places, in_places, 1, 1), jnp.float32) * 0.1,
        "bn1": make_bn(keys[1], places),
        "w2": jax.random.normal(keys[2], (places, places, 3, 3), jnp.float32) * 0.1,
        "bn2": make_bn(keys[3], places),
        "w3": jax.random.normal(keys[4], (places * expansion, places, 1, 1), jnp.float32) * 0.1,
        "bn3": make_bn(keys[5], places * expansion),
    }
    if downsampling:
        p["wd"] = jax.random.normal(keys[6], (places * expansion, in_places, 1, 1), jnp.float32) * 0.1
        p["bnd"] = make_bn(keys[7], places * expansion)
    return p


def ref_forward(x_nchw, params, *, stride, downsampling):
    x = jnp.transpose(x_nchw, (0, 2, 3, 1))

    def conv(h, w_oihw, s, pad):
        return jax.lax.conv_general_dilated(
            h, jnp.transpose(w_oihw, (2, 3, 1, 0)), (s, s),
            ((pad, pad), (pad, pad)),
            dimension_numbers=("NHWC", "HWIO", "NHWC"))

    def bn(h, p):
        sc = p["gamma"] / jnp.sqrt(p["var"] + EPS)
        return h * sc + (p["beta"] - p["mean"] * sc)

    out = jax.nn.relu(bn(conv(x, params["w1"], 1, 0), params["bn1"]))
    out = jax.nn.relu(bn(conv(out, params["w2"], stride, 1), params["bn2"]))
    out = bn(conv(out, params["w3"], 1, 0), params["bn3"])
    res = x
    if downsampling:
        res = bn(conv(x, params["wd"], stride, 0), params["bnd"])
    out = jax.nn.relu(out + res)
    return jnp.transpose(out, (0, 3, 1, 2))


if __name__ == "__main__":
    key = jax.random.PRNGKey(0)
    kx, kp1, kp2 = jax.random.split(key, 3)

    # Config A: stride-2 downsampling bottleneck (first block of a stage).
    in_places, places, expansion, stride = 8, 4, 4, 2
    x = jax.random.normal(kx, (2, in_places, 16, 16), jnp.float32)
    params_a = make_params(kp1, in_places, places, expansion, downsampling=True)
    ref_a = ref_forward(x, params_a, stride=stride, downsampling=True)

    # f32 mode: strict numerical check of the kernels.
    out_a32 = jax.block_until_ready(
        bottleneck_forward(x, params_a, stride=stride, downsampling=True,
                           compute_dtype=jnp.float32))
    assert out_a32.shape == (2, places * expansion, 8, 8)
    assert jnp.allclose(out_a32, ref_a, atol=1e-4, rtol=1e-4)

    # bf16 mode (f32 accumulation): production path, looser tolerance.
    out_a16 = jax.block_until_ready(
        bottleneck_forward(x, params_a, stride=stride, downsampling=True,
                           compute_dtype=jnp.bfloat16))
    assert out_a16.shape == (2, places * expansion, 8, 8)
    assert jnp.allclose(out_a16, ref_a, atol=1e-1, rtol=1e-1)

    # Config B: identity-residual bottleneck (in_places == places*expansion, stride 1).
    params_b = make_params(kp2, places * expansion, places, expansion, downsampling=False)
    x_b = jax.random.normal(kx, (2, places * expansion, 16, 16), jnp.float32)
    ref_b = ref_forward(x_b, params_b, stride=1, downsampling=False)

    out_b32 = jax.block_until_ready(
        bottleneck_forward(x_b, params_b, stride=1, downsampling=False,
                           compute_dtype=jnp.float32))
    assert out_b32.shape == (2, places * expansion, 16, 16)
    assert jnp.allclose(out_b32, ref_b, atol=1e-4, rtol=1e-4)

    out_b16 = jax.block_until_ready(
        bottleneck_forward(x_b, params_b, stride=1, downsampling=False,
                           compute_dtype=jnp.bfloat16))
    assert jnp.allclose(out_b16, ref_b, atol=1e-1, rtol=1e-1)

    print("KERNEL_OK")
</pallas_src>

<mosaic_0001>
module attributes {stable_mosaic.version = 11 : i64} {
  func.func @_conv12_kernel(%arg0: i32, %arg1: i32, %arg2: memref<4x88x8xf32, #tpu.memory_space<vmem>>, %arg3: memref<4x88x1xf32, #tpu.memory_space<vmem>>, %arg4: memref<8x128xf32, #tpu.memory_space<vmem>>, %arg5: memref<1x128xf32, #tpu.memory_space<vmem>>, %arg6: memref<9x128x128xf32, #tpu.memory_space<vmem>>, %arg7: memref<1x128xf32, #tpu.memory_space<vmem>>, %arg8: memref<1x72x128xf32, #tpu.memory_space<vmem>>, %arg9: memref<4x88x128xf32, #tpu.memory_space<vmem>>, %arg10: memref<72x128xf32, #tpu.memory_space<vmem>>) attributes {dimension_semantics = [#tpu.dimension_semantics<parallel>, #tpu.dimension_semantics<parallel>], iteration_bounds = array<i64: 2, 1>, scalar_prefetch = 0 : i64, scratch_operands = 2 : i64, tpu.core_type = #tpu.core_type<tc>, window_params = [{transform_indices = @transform_0, window_bounds = array<i64: 4, 88, 8>}, {pipeline_mode = #tpu.pipeline_mode<synchronous>, transform_indices = @transform_1, window_bounds = array<i64: 4, 88, 1>}, {pipeline_mode = #tpu.pipeline_mode<synchronous>, transform_indices = @transform_2, window_bounds = array<i64: 8, 128>}, {pipeline_mode = #tpu.pipeline_mode<synchronous>, transform_indices = @transform_3, window_bounds = array<i64: 1, 128>}, {pipeline_mode = #tpu.pipeline_mode<synchronous>, transform_indices = @transform_4, window_bounds = array<i64: 9, 128, 128>}, {pipeline_mode = #tpu.pipeline_mode<synchronous>, transform_indices = @transform_5, window_bounds = array<i64: 1, 128>}, {transform_indices = @transform_6, window_bounds = array<i64: 1, 72, 128>}]} {
    %c72_i32 = arith.constant 72 : i32
    %0 = arith.muli %arg1, %c72_i32 : i32
    %1 = tpu.assume_multiple %0, 8 : i32
    %c0 = arith.constant 0 : index
    %2 = arith.index_cast %1 : i32 to index
    %c0_0 = arith.constant 0 : index
    %3 = vector.load %arg2[%c0, %2, %c0_0] : memref<4x88x8xf32, #tpu.memory_space<vmem>>, vector<1x88x8xf32>
    %4 = vector.shape_cast %3 : vector<1x88x8xf32> to vector<88x8xf32>
    %c0_1 = arith.constant 0 : index
    %c0_2 = arith.constant 0 : index
    %5 = vector.load %arg4[%c0_1, %c0_2] : memref<8x128xf32, #tpu.memory_space<vmem>>, vector<8x128xf32>
    %cst = arith.constant dense<0.000000e+00> : vector<88x128xf32>
    %6 = tpu.matmul %4, %5, %cst {dimension_numbers = #tpu.dot_dimension_numbers<[1], [0], [0], [1], [0, 0, 1, 1], [], []>} : vector<88x8xf32>, vector<8x128xf32>, vector<88x128xf32> -> vector<88x128xf32>
    %c0_3 = arith.constant 0 : index
    %c0_4 = arith.constant 0 : index
    %7 = vector.load %arg5[%c0_3, %c0_4] : memref<1x128xf32, #tpu.memory_space<vmem>>, vector<1x128xf32>
    %8 = vector.broadcast %7 : vector<1x128xf32> to vector<88x128xf32>
    %9 = arith.addf %6, %8 : vector<88x128xf32>
    %cst_5 = arith.constant 0.000000e+00 : f32
    %10 = vector.broadcast %cst_5 : f32 to vector<88x128xf32>
    %11 = arith.maximumf %9, %10 : vector<88x128xf32>
    %c0_6 = arith.constant 0 : index
    %12 = arith.index_cast %1 : i32 to index
    %c0_7 = arith.constant 0 : index
    %13 = vector.load %arg3[%c0_6, %12, %c0_7] : memref<4x88x1xf32, #tpu.memory_space<vmem>>, vector<1x88x1xf32>
    %14 = vector.shape_cast %13 : vector<1x88x1xf32> to vector<88x1xf32>
    %15 = vector.broadcast %14 : vector<88x1xf32> to vector<88x128xf32>
    %16 = arith.mulf %11, %15 : vector<88x128xf32>
    %c0_8 = arith.constant 0 : index
    %c0_9 = arith.constant 0 : index
    %c0_10 = arith.constant 0 : index
    %17 = vector.load %arg9[%c0_8, %c0_9, %c0_10] : memref<4x88x128xf32, #tpu.memory_space<vmem>>, vector<1x88x128xf32>
    %18 = vector.shape_cast %17 : vector<1x88x128xf32> to vector<88x128xf32>
    %19 = vector.shape_cast %16 : vector<88x128xf32> to vector<1x88x128xf32>
    tpu.vector_store %arg9[%c0_8, %c0_9, %c0_10], %19 {strides = array<i32>} : memref<4x88x128xf32, #tpu.memory_space<vmem>>, vector<1x88x128xf32>,
    %c1 = arith.constant 1 : index
    %20 = arith.index_cast %1 : i32 to index
    %c0_11 = arith.constant 0 : index
    %21 = vector.load %arg2[%c1, %20, %c0_11] : memref<4x88x8xf32, #tpu.memory_space<vmem>>, vector<1x88x8xf32>
    %22 = vector.shape_cast %21 : vector<1x88x8xf32> to vector<88x8xf32>
    %c0_12 = arith.constant 0 : index
    %c0_13 = arith.constant 0 : index
    %23 = vector.load %arg4[%c0_12, %c0_13] : memref<8x128xf32, #tpu.memory_space<vmem>>, vector<8x128xf32>
    %cst_14 = arith.constant dense<0.000000e+00> : vector<88x128xf32>
    %24 = tpu.matmul %22, %23, %cst_14 {dimension_numbers = #tpu.dot_dimension_numbers<[1], [0], [0], [1], [0, 0, 1, 1], [], []>} : vector<88x8xf32>, vector<8x128xf32>, vector<88x128xf32> -> vector<88x128xf32>
    %c0_15 = arith.constant 0 : index
    %c0_16 = arith.constant 0 : index
    %25 = vector.load %arg5[%c0_15, %c0_16] : memref<1x128xf32, #tpu.memory_space<vmem>>, vector<1x128xf32>
    %26 = vector.broadcast %25 : vector<1x128xf32> to vector<88x128xf32>
    %27 = arith.addf %24, %26 : vector<88x128xf32>
    %cst_17 = arith.constant 0.000000e+00 : f32
    %28 = vector.broadcast %cst_17 : f32 to vector<88x128xf32>
    %29 = arith.maximumf %27, %28 : vector<88x128xf32>
    %c1_18 = arith.constant 1 : index
    %30 = arith.index_cast %1 : i32 to index
    %c0_19 = arith.constant 0 : index
    %31 = vector.load %arg3[%c1_18, %30, %c0_19] : memref<4x88x1xf32, #tpu.memory_space<vmem>>, vector<1x88x1xf32>
    %32 = vector.shape_cast %31 : vector<1x88x1xf32> to vector<88x1xf32>
    %33 = vector.broadcast %32 : vector<88x1xf32> to vector<88x128xf32>
    %34 = arith.mulf %29, %33 : vector<88x128xf32>
    %c1_20 = arith.constant 1 : index
    %c0_21 = arith.constant 0 : index
    %c0_22 = arith.constant 0 : index
    %35 = vector.load %arg9[%c1_20, %c0_21, %c0_22] : memref<4x88x128xf32, #tpu.memory_space<vmem>>, vector<1x88x128xf32>
    %36 = vector.shape_cast %35 : vector<1x88x128xf32> to vector<88x128xf32>
    %37 = vector.shape_cast %34 : vector<88x128xf32> to vector<1x88x128xf32>
    tpu.vector_store %arg9[%c1_20, %c0_21, %c0_22], %37 {strides = array<i32>} : memref<4x88x128xf32, #tpu.memory_space<vmem>>, vector<1x88x128xf32>,
    %c2 = arith.constant 2 : index
    %38 = arith.index_cast %1 : i32 to index
    %c0_23 = arith.constant 0 : index
    %39 = vector.load %arg2[%c2, %38, %c0_23] : memref<4x88x8xf32, #tpu.memory_space<vmem>>, vector<1x88x8xf32>
    %40 = vector.shape_cast %39 : vector<1x88x8xf32> to vector<88x8xf32>
    %c0_24 = arith.constant 0 : index
    %c0_25 = arith.constant 0 : index
    %41 = vector.load %arg4[%c0_24, %c0_25] : memref<8x128xf32, #tpu.memory_space<vmem>>, vector<8x128xf32>
    %cst_26 = arith.constant dense<0.000000e+00> : vector<88x128xf32>
    %42 = tpu.matmul %40, %41, %cst_26 {dimension_numbers = #tpu.dot_dimension_numbers<[1], [0], [0], [1], [0, 0, 1, 1], [], []>} : vector<88x8xf32>, vector<8x128xf32>, vector<88x128xf32> -> vector<88x128xf32>
    %c0_27 = arith.constant 0 : index
    %c0_28 = arith.constant 0 : index
    %43 = vector.load %arg5[%c0_27, %c0_28] : memref<1x128xf32, #tpu.memory_space<vmem>>, vector<1x128xf32>
    %44 = vector.broadcast %43 : vector<1x128xf32> to vector<88x128xf32>
    %45 = arith.addf %42, %44 : vector<88x128xf32>
    %cst_29 = arith.constant 0.000000e+00 : f32
    %46 = vector.broadcast %cst_29 : f32 to vector<88x128xf32>
    %47 = arith.maximumf %45, %46 : vector<88x128xf32>
    %c2_30 = arith.constant 2 : index
    %48 = arith.index_cast %1 : i32 to index
    %c0_31 = arith.constant 0 : index
    %49 = vector.load %arg3[%c2_30, %48, %c0_31] : memref<4x88x1xf32, #tpu.memory_space<vmem>>, vector<1x88x1xf32>
    %50 = vector.shape_cast %49 : vector<1x88x1xf32> to vector<88x1xf32>
    %51 = vector.broadcast %50 : vector<88x1xf32> to vector<88x128xf32>
    %52 = arith.mulf %47, %51 : vector<88x128xf32>
    %c2_32 = arith.constant 2 : index
    %c0_33 = arith.constant 0 : index
    %c0_34 = arith.constant 0 : index
    %53 = vector.load %arg9[%c2_32, %c0_33, %c0_34] : memref<4x88x128xf32, #tpu.memory_space<vmem>>, vector<1x88x128xf32>
    %54 = vector.shape_cast %53 : vector<1x88x128xf32> to vector<88x128xf32>
    %55 = vector.shape_cast %52 : vector<88x128xf32> to vector<1x88x128xf32>
    tpu.vector_store %arg9[%c2_32, %c0_33, %c0_34], %55 {strides = array<i32>} : memref<4x88x128xf32, #tpu.memory_space<vmem>>, vector<1x88x128xf32>,
    %c3 = arith.constant 3 : index
    %56 = arith.index_cast %1 : i32 to index
    %c0_35 = arith.constant 0 : index
    %57 = vector.load %arg2[%c3, %56, %c0_35] : memref<4x88x8xf32, #tpu.memory_space<vmem>>, vector<1x88x8xf32>
    %58 = vector.shape_cast %57 : vector<1x88x8xf32> to vector<88x8xf32>
    %c0_36 = arith.constant 0 : index
    %c0_37 = arith.constant 0 : index
    %59 = vector.load %arg4[%c0_36, %c0_37] : memref<8x128xf32, #tpu.memory_space<vmem>>, vector<8x128xf32>
    %cst_38 = arith.constant dense<0.000000e+00> : vector<88x128xf32>
    %60 = tpu.matmul %58, %59, %cst_38 {dimension_numbers = #tpu.dot_dimension_numbers<[1], [0], [0], [1], [0, 0, 1, 1], [], []>} : vector<88x8xf32>, vector<8x128xf32>, vector<88x128xf32> -> vector<88x128xf32>
    %c0_39 = arith.constant 0 : index
    %c0_40 = arith.constant 0 : index
    %61 = vector.load %arg5[%c0_39, %c0_40] : memref<1x128xf32, #tpu.memory_space<vmem>>, vector<1x128xf32>
    %62 = vector.broadcast %61 : vector<1x128xf32> to vector<88x128xf32>
    %63 = arith.addf %60, %62 : vector<88x128xf32>
    %cst_41 = arith.constant 0.000000e+00 : f32
    %64 = vector.broadcast %cst_41 : f32 to vector<88x128xf32>
    %65 = arith.maximumf %63, %64 : vector<88x128xf32>
    %c3_42 = arith.constant 3 : index
    %66 = arith.index_cast %1 : i32 to index
    %c0_43 = arith.constant 0 : index
    %67 = vector.load %arg3[%c3_42, %66, %c0_43] : memref<4x88x1xf32, #tpu.memory_space<vmem>>, vector<1x88x1xf32>
    %68 = vector.shape_cast %67 : vector<1x88x1xf32> to vector<88x1xf32>
    %69 = vector.broadcast %68 : vector<88x1xf32> to vector<88x128xf32>
    %70 = arith.mulf %65, %69 : vector<88x128xf32>
    %c3_44 = arith.constant 3 : index
    %c0_45 = arith.constant 0 : index
    %c0_46 = arith.constant 0 : index
    %71 = vector.load %arg9[%c3_44, %c0_45, %c0_46] : memref<4x88x128xf32, #tpu.memory_space<vmem>>, vector<1x88x128xf32>
    %72 = vector.shape_cast %71 : vector<1x88x128xf32> to vector<88x128xf32>
    %73 = vector.shape_cast %70 : vector<88x128xf32> to vector<1x88x128xf32>
    tpu.vector_store %arg9[%c3_44, %c0_45, %c0_46], %73 {strides = array<i32>} : memref<4x88x128xf32, #tpu.memory_space<vmem>>, vector<1x88x128xf32>,
    %c0_47 = arith.constant 0 : index
    %c0_48 = arith.constant 0 : index
    %c0_49 = arith.constant 0 : index
    %74 = vector.load %arg9[%c0_47, %c0_48, %c0_49] : memref<4x88x128xf32, #tpu.memory_space<vmem>>, vector<1x72x128xf32>
    %75 = vector.shape_cast %74 : vector<1x72x128xf32> to vector<72x128xf32>
    %c0_50 = arith.constant 0 : index
    %c0_51 = arith.constant 0 : index
    %c0_52 = arith.constant 0 : index
    %76 = vector.load %arg6[%c0_50, %c0_51, %c0_52] : memref<9x128x128xf32, #tpu.memory_space<vmem>>, vector<1x128x128xf32>
    %77 = vector.shape_cast %76 : vector<1x128x128xf32> to vector<128x128xf32>
    %cst_53 = arith.constant dense<0.000000e+00> : vector<72x128xf32>
    %78 = tpu.matmul %75, %77, %cst_53 {dimension_numbers = #tpu.dot_dimension_numbers<[1], [0], [0], [1], [0, 0, 1, 1], [], []>} : vector<72x128xf32>, vector<128x128xf32>, vector<72x128xf32> -> vector<72x128xf32>
    %c0_54 = arith.constant 0 : index
    %c0_55 = arith.constant 0 : index
    %79 = vector.load %arg10[%c0_54, %c0_55] : memref<72x128xf32, #tpu.memory_space<vmem>>, vector<72x128xf32>
    tpu.vector_store %arg10[%c0_54, %c0_55], %78 {strides = array<i32>} : memref<72x128xf32, #tpu.memory_space<vmem>>, vector<72x128xf32>,
    %c1_56 = arith.constant 1 : index
    %c0_57 = arith.constant 0 : index
    %c0_58 = arith.constant 0 : index
    %80 = vector.load %arg9[%c1_56, %c0_57, %c0_58] : memref<4x88x128xf32, #tpu.memory_space<vmem>>, vector<1x72x128xf32>
    %81 = vector.shape_cast %80 : vector<1x72x128xf32> to vector<72x128xf32>
    %c1_59 = arith.constant 1 : index
    %c0_60 = arith.constant 0 : index
    %c0_61 = arith.constant 0 : index
    %82 = vector.load %arg6[%c1_59, %c0_60, %c0_61] : memref<9x128x128xf32, #tpu.memory_space<vmem>>, vector<1x128x128xf32>
    %83 = vector.shape_cast %82 : vector<1x128x128xf32> to vector<128x128xf32>
    %cst_62 = arith.constant dense<0.000000e+00> : vector<72x128xf32>
    %84 = tpu.matmul %81, %83, %cst_62 {dimension_numbers = #tpu.dot_dimension_numbers<[1], [0], [0], [1], [0, 0, 1, 1], [], []>} : vector<72x128xf32>, vector<128x128xf32>, vector<72x128xf32> -> vector<72x128xf32>
    %c0_63 = arith.constant 0 : index
    %c0_64 = arith.constant 0 : index
    %85 = vector.load %arg10[%c0_63, %c0_64] : memref<72x128xf32, #tpu.memory_space<vmem>>, vector<72x128xf32>
    %86 = arith.addf %85, %84 : vector<72x128xf32>
    %c0_65 = arith.constant 0 : index
    %c0_66 = arith.constant 0 : index
    %87 = vector.load %arg10[%c0_65, %c0_66] : memref<72x128xf32, #tpu.memory_space<vmem>>, vector<72x128xf32>
    tpu.vector_store %arg10[%c0_65, %c0_66], %86 {strides = array<i32>} : memref<72x128xf32, #tpu.memory_space<vmem>>, vector<72x128xf32>,
    %c0_67 = arith.constant 0 : index
    %c1_68 = arith.constant 1 : index
    %c0_69 = arith.constant 0 : index
    %88 = vector.load %arg9[%c0_67, %c1_68, %c0_69] : memref<4x88x128xf32, #tpu.memory_space<vmem>>, vector<1x72x128xf32>
    %89 = vector.shape_cast %88 : vector<1x72x128xf32> to vector<72x128xf32>
    %c2_70 = arith.constant 2 : index
    %c0_71 = arith.constant 0 : index
    %c0_72 = arith.constant 0 : index
    %90 = vector.load %arg6[%c2_70, %c0_71, %c0_72] : memref<9x128x128xf32, #tpu.memory_space<vmem>>, vector<1x128x128xf32>
    %91 = vector.shape_cast %90 : vector<1x128x128xf32> to vector<128x128xf32>
    %cst_73 = arith.constant dense<0.000000e+00> : vector<72x128xf32>
    %92 = tpu.matmul %89, %91, %cst_73 {dimension_numbers = #tpu.dot_dimension_numbers<[1], [0], [0], [1], [0, 0, 1, 1], [], []>} : vector<72x128xf32>, vector<128x128xf32>, vector<72x128xf32> -> vector<72x128xf32>
    %c0_74 = arith.constant 0 : index
    %c0_75 = arith.constant 0 : index
    %93 = vector.load %arg10[%c0_74, %c0_75] : memref<72x128xf32, #tpu.memory_space<vmem>>, vector<72x128xf32>
    %94 = arith.addf %93, %92 : vector<72x128xf32>
    %c0_76 = arith.constant 0 : index
    %c0_77 = arith.constant 0 : index
    %95 = vector.load %arg10[%c0_76, %c0_77] : memref<72x128xf32, #tpu.memory_space<vmem>>, vector<72x128xf32>
    tpu.vector_store %arg10[%c0_76, %c0_77], %94 {strides = array<i32>} : memref<72x128xf32, #tpu.memory_space<vmem>>, vector<72x128xf32>,
    %c2_78 = arith.constant 2 : index
    %c0_79 = arith.constant 0 : index
    %c0_80 = arith.constant 0 : index
    %96 = vector.load %arg9[%c2_78, %c0_79, %c0_80] : memref<4x88x128xf32, #tpu.memory_space<vmem>>, vector<1x72x128xf32>
    %97 = vector.shape_cast %96 : vector<1x72x128xf32> to vector<72x128xf32>
    %c3_81 = arith.constant 3 : index
    %c0_82 = arith.constant 0 : index
    %c0_83 = arith.constant 0 : index
    %98 = vector.load %arg6[%c3_81, %c0_82, %c0_83] : memref<9x128x128xf32, #tpu.memory_space<vmem>>, vector<1x128x128xf32>
    %99 = vector.shape_cast %98 : vector<1x128x128xf32> to vector<128x128xf32>
    %cst_84 = arith.constant dense<0.000000e+00> : vector<72x128xf32>
    %100 = tpu.matmul %97, %99, %cst_84 {dimension_numbers = #tpu.dot_dimension_numbers<[1], [0], [0], [1], [0, 0, 1, 1], [], []>} : vector<72x128xf32>, vector<128x128xf32>, vector<72x128xf32> -> vector<72x128xf32>
    %c0_85 = arith.constant 0 : index
    %c0_86 = arith.constant 0 : index
    %101 = vector.load %arg10[%c0_85, %c0_86] : memref<72x128xf32, #tpu.memory_space<vmem>>, vector<72x128xf32>
    %102 = arith.addf %101, %100 : vector<72x128xf32>
    %c0_87 = arith.constant 0 : index
    %c0_88 = arith.constant 0 : index
    %103 = vector.load %arg10[%c0_87, %c0_88] : memref<72x128xf32, #tpu.memory_space<vmem>>, vector<72x128xf32>
    tpu.vector_store %arg10[%c0_87, %c0_88], %102 {strides = array<i32>} : memref<72x128xf32, #tpu.memory_space<vmem>>, vector<72x128xf32>,
    %c3_89 = arith.constant 3 : index
    %c0_90 = arith.constant 0 : index
    %c0_91 = arith.constant 0 : index
    %104 = vector.load %arg9[%c3_89, %c0_90, %c0_91] : memref<4x88x128xf32, #tpu.memory_space<vmem>>, vector<1x72x128xf32>
    %105 = vector.shape_cast %104 : vector<1x72x128xf32> to vector<72x128xf32>
    %c4 = arith.constant 4 : index
    %c0_92 = arith.constant 0 : index
    %c0_93 = arith.constant 0 : index
    %106 = vector.load %arg6[%c4, %c0_92, %c0_93] : memref<9x128x128xf32, #tpu.memory_space<vmem>>, vector<1x128x128xf32>
    %107 = vector.shape_cast %106 : vector<1x128x128xf32> to vector<128x128xf32>
    %cst_94 = arith.constant dense<0.000000e+00> : vector<72x128xf32>
    %108 = tpu.matmul %105, %107, %cst_94 {dimension_numbers = #tpu.dot_dimension_numbers<[1], [0], [0], [1], [0, 0, 1, 1], [], []>} : vector<72x128xf32>, vector<128x128xf32>, vector<72x128xf32> -> vector<72x128xf32>
    %c0_95 = arith.constant 0 : index
    %c0_96 = arith.constant 0 : index
    %109 = vector.load %arg10[%c0_95, %c0_96] : memref<72x128xf32, #tpu.memory_space<vmem>>, vector<72x128xf32>
    %110 = arith.addf %109, %108 : vector<72x128xf32>
    %c0_97 = arith.constant 0 : index
    %c0_98 = arith.constant 0 : index
    %111 = vector.load %arg10[%c0_97, %c0_98] : memref<72x128xf32, #tpu.memory_space<vmem>>, vector<72x128xf32>
    tpu.vector_store %arg10[%c0_97, %c0_98], %110 {strides = array<i32>} : memref<72x128xf32, #tpu.memory_space<vmem>>, vector<72x128xf32>,
    %c2_99 = arith.constant 2 : index
    %c1_100 = arith.constant 1 : index
    %c0_101 = arith.constant 0 : index
    %112 = vector.load %arg9[%c2_99, %c1_100, %c0_101] : memref<4x88x128xf32, #tpu.memory_space<vmem>>, vector<1x72x128xf32>
    %113 = vector.shape_cast %112 : vector<1x72x128xf32> to vector<72x128xf32>
    %c5 = arith.constant 5 : index
    %c0_102 = arith.constant 0 : index
    %c0_103 = arith.constant 0 : index
    %114 = vector.load %arg6[%c5, %c0_102, %c0_103] : memref<9x128x128xf32, #tpu.memory_space<vmem>>, vector<1x128x128xf32>
    %115 = vector.shape_cast %114 : vector<1x128x128xf32> to vector<128x128xf32>
    %cst_104 = arith.constant dense<0.000000e+00> : vector<72x128xf32>
    %116 = tpu.matmul %113, %115, %cst_104 {dimension_numbers = #tpu.dot_dimension_numbers<[1], [0], [0], [1], [0, 0, 1, 1], [], []>} : vector<72x128xf32>, vector<128x128xf32>, vector<72x128xf32> -> vector<72x128xf32>
    %c0_105 = arith.constant 0 : index
    %c0_106 = arith.constant 0 : index
    %117 = vector.load %arg10[%c0_105, %c0_106] : memref<72x128xf32, #tpu.memory_space<vmem>>, vector<72x128xf32>
    %118 = arith.addf %117, %116 : vector<72x128xf32>
    %c0_107 = arith.constant 0 : index
    %c0_108 = arith.constant 0 : index
    %119 = vector.load %arg10[%c0_107, %c0_108] : memref<72x128xf32, #tpu.memory_space<vmem>>, vector<72x128xf32>
    tpu.vector_store %arg10[%c0_107, %c0_108], %118 {strides = array<i32>} : memref<72x128xf32, #tpu.memory_space<vmem>>, vector<72x128xf32>,
    %c0_109 = arith.constant 0 : index
    %c9 = arith.constant 9 : index
    %c0_110 = arith.constant 0 : index
    %120 = vector.load %arg9[%c0_109, %c9, %c0_110] : memref<4x88x128xf32, #tpu.memory_space<vmem>>, vector<1x72x128xf32>
    %121 = vector.shape_cast %120 : vector<1x72x128xf32> to vector<72x128xf32>
    %c6 = arith.constant 6 : index
    %c0_111 = arith.constant 0 : index
    %c0_112 = arith.constant 0 : index
    %122 = vector.load %arg6[%c6, %c0_111, %c0_112] : memref<9x128x128xf32, #tpu.memory_space<vmem>>, vector<1x128x128xf32>
    %123 = vector.shape_cast %122 : vector<1x128x128xf32> to vector<128x128xf32>
    %cst_113 = arith.constant dense<0.000000e+00> : vector<72x128xf32>
    %124 = tpu.matmul %121, %123, %cst_113 {dimension_numbers = #tpu.dot_dimension_numbers<[1], [0], [0], [1], [0, 0, 1, 1], [], []>} : vector<72x128xf32>, vector<128x128xf32>, vector<72x128xf32> -> vector<72x128xf32>
    %c0_114 = arith.constant 0 : index
    %c0_115 = arith.constant 0 : index
    %125 = vector.load %arg10[%c0_114, %c0_115] : memref<72x128xf32, #tpu.memory_space<vmem>>, vector<72x128xf32>
    %126 = arith.addf %125, %124 : vector<72x128xf32>
    %c0_116 = arith.constant 0 : index
    %c0_117 = arith.constant 0 : index
    %127 = vector.load %arg10[%c0_116, %c0_117] : memref<72x128xf32, #tpu.memory_space<vmem>>, vector<72x128xf32>
    tpu.vector_store %arg10[%c0_116, %c0_117], %126 {strides = array<i32>} : memref<72x128xf32, #tpu.memory_space<vmem>>, vector<72x128xf32>,
    %c1_118 = arith.constant 1 : index
    %c9_119 = arith.constant 9 : index
    %c0_120 = arith.constant 0 : index
    %128 = vector.load %arg9[%c1_118, %c9_119, %c0_120] : memref<4x88x128xf32, #tpu.memory_space<vmem>>, vector<1x72x128xf32>
    %129 = vector.shape_cast %128 : vector<1x72x128xf32> to vector<72x128xf32>
    %c7 = arith.constant 7 : index
    %c0_121 = arith.constant 0 : index
    %c0_122 = arith.constant 0 : index
    %130 = vector.load %arg6[%c7, %c0_121, %c0_122] : memref<9x128x128xf32, #tpu.memory_space<vmem>>, vector<1x128x128xf32>
    %131 = vector.shape_cast %130 : vector<1x128x128xf32> to vector<128x128xf32>
    %cst_123 = arith.constant dense<0.000000e+00> : vector<72x128xf32>
    %132 = tpu.matmul %129, %131, %cst_123 {dimension_numbers = #tpu.dot_dimension_numbers<[1], [0], [0], [1], [0, 0, 1, 1], [], []>} : vector<72x128xf32>, vector<128x128xf32>, vector<72x128xf32> -> vector<72x128xf32>
    %c0_124 = arith.constant 0 : index
    %c0_125 = arith.constant 0 : index
    %133 = vector.load %arg10[%c0_124, %c0_125] : memref<72x128xf32, #tpu.memory_space<vmem>>, vector<72x128xf32>
    %134 = arith.addf %133, %132 : vector<72x128xf32>
    %c0_126 = arith.constant 0 : index
    %c0_127 = arith.constant 0 : index
    %135 = vector.load %arg10[%c0_126, %c0_127] : memref<72x128xf32, #tpu.memory_space<vmem>>, vector<72x128xf32>
    tpu.vector_store %arg10[%c0_126, %c0_127], %134 {strides = array<i32>} : memref<72x128xf32, #tpu.memory_space<vmem>>, vector<72x128xf32>,
    %c0_128 = arith.constant 0 : index
    %c10 = arith.constant 10 : index
    %c0_129 = arith.constant 0 : index
    %136 = vector.load %arg9[%c0_128, %c10, %c0_129] : memref<4x88x128xf32, #tpu.memory_space<vmem>>, vector<1x72x128xf32>
    %137 = vector.shape_cast %136 : vector<1x72x128xf32> to vector<72x128xf32>
    %c8 = arith.constant 8 : index
    %c0_130 = arith.constant 0 : index
    %c0_131 = arith.constant 0 : index
    %138 = vector.load %arg6[%c8, %c0_130, %c0_131] : memref<9x128x128xf32, #tpu.memory_space<vmem>>, vector<1x128x128xf32>
    %139 = vector.shape_cast %138 : vector<1x128x128xf32> to vector<128x128xf32>
    %cst_132 = arith.constant dense<0.000000e+00> : vector<72x128xf32>
    %140 = tpu.matmul %137, %139, %cst_132 {dimension_numbers = #tpu.dot_dimension_numbers<[1], [0], [0], [1], [0, 0, 1, 1], [], []>} : vector<72x128xf32>, vector<128x128xf32>, vector<72x128xf32> -> vector<72x128xf32>
    %c0_133 = arith.constant 0 : index
    %c0_134 = arith.constant 0 : index
    %141 = vector.load %arg10[%c0_133, %c0_134] : memref<72x128xf32, #tpu.memory_space<vmem>>, vector<72x128xf32>
    %142 = arith.addf %141, %140 : vector<72x128xf32>
    %c0_135 = arith.constant 0 : index
    %c0_136 = arith.constant 0 : index
    %143 = vector.load %arg10[%c0_135, %c0_136] : memref<72x128xf32, #tpu.memory_space<vmem>>, vector<72x128xf32>
    tpu.vector_store %arg10[%c0_135, %c0_136], %142 {strides = array<i32>} : memref<72x128xf32, #tpu.memory_space<vmem>>, vector<72x128xf32>,
    %c0_137 = arith.constant 0 : index
    %c0_138 = arith.constant 0 : index
    %144 = vector.load %arg10[%c0_137, %c0_138] : memref<72x128xf32, #tpu.memory_space<vmem>>, vector<72x128xf32>
    %c0_139 = arith.constant 0 : index
    %c0_140 = arith.constant 0 : index
    %145 = vector.load %arg7[%c0_139, %c0_140] : memref<1x128xf32, #tpu.memory_space<vmem>>, vector<1x128xf32>
    %146 = vector.broadcast %145 : vector<1x128xf32> to vector<72x128xf32>
    %147 = arith.addf %144, %146 : vector<72x128xf32>
    %cst_141 = arith.constant 0.000000e+00 : f32
    %148 = vector.broadcast %cst_141 : f32 to vector<72x128xf32>
    %149 = arith.maximumf %147, %148 : vector<72x128xf32>
    %c0_142 = arith.constant 0 : index
    %c0_143 = arith.constant 0 : index
    %c0_144 = arith.constant 0 : index
    %150 = vector.load %arg8[%c0_142, %c0_143, %c0_144] : memref<1x72x128xf32, #tpu.memory_space<vmem>>, vector<1x72x128xf32>
    %151 = vector.shape_cast %150 : vector<1x72x128xf32> to vector<72x128xf32>
    %152 = vector.shape_cast %149 : vector<72x128xf32> to vector<1x72x128xf32>
    tpu.vector_store %arg8[%c0_142, %c0_143, %c0_144], %152 {strides = array<i32>} : memref<1x72x128xf32, #tpu.memory_space<vmem>>, vector<1x72x128xf32>,
    return
  }
  func.func @transform_0(%arg0: i32, %arg1: i32) -> (i32, i32, i32) {
    %c0_i32 = arith.constant 0 : i32
    %c0_i32_0 = arith.constant 0 : i32
    %c0_i32_1 = arith.constant 0 : i32
    return %arg0, %c0_i32, %c0_i32_0 : i32, i32, i32
  }
  func.func @transform_1(%arg0: i32, %arg1: i32) -> (i32, i32, i32) {
    %c0_i32 = arith.constant 0 : i32
    %c0_i32_0 = arith.constant 0 : i32
    %c0_i32_1 = arith.constant 0 : i32
    %c0_i32_2 = arith.constant 0 : i32
    return %c0_i32, %c0_i32_0, %c0_i32_1 : i32, i32, i32
  }
  func.func @transform_2(%arg0: i32, %arg1: i32) -> (i32, i32) {
    %c0_i32 = arith.constant 0 : i32
    %c0_i32_0 = arith.constant 0 : i32
    %c0_i32_1 = arith.constant 0 : i32
    return %c0_i32, %c0_i32_0 : i32, i32
  }
  func.func @transform_3(%arg0: i32, %arg1: i32) -> (i32, i32) {
    %c0_i32 = arith.constant 0 : i32
    %c0_i32_0 = arith.constant 0 : i32
    %c0_i32_1 = arith.constant 0 : i32
    return %c0_i32, %c0_i32_0 : i32, i32
  }
  func.func @transform_4(%arg0: i32, %arg1: i32) -> (i32, i32, i32) {
    %c0_i32 = arith.constant 0 : i32
    %c0_i32_0 = arith.constant 0 : i32
    %c0_i32_1 = arith.constant 0 : i32
    %c0_i32_2 = arith.constant 0 : i32
    return %c0_i32, %c0_i32_0, %c0_i32_1 : i32, i32, i32
  }
  func.func @transform_5(%arg0: i32, %arg1: i32) -> (i32, i32) {
    %c0_i32 = arith.constant 0 : i32
    %c0_i32_0 = arith.constant 0 : i32
    %c0_i32_1 = arith.constant 0 : i32
    return %c0_i32, %c0_i32_0 : i32, i32
  }
  func.func @transform_6(%arg0: i32, %arg1: i32) -> (i32, i32, i32) {
    %c0_i32 = arith.constant 0 : i32
    %c0_i32_0 = arith.constant 0 : i32
    return %arg0, %arg1, %c0_i32 : i32, i32, i32
  }
}

</mosaic_0001>

<llo_original>
// kernel: tpu_custom_call.1
$region0: #{tpu_custom_call.1}
  #allocation0 [shape = 'u32[]', space=smem, size = 0x4, offset = 0x4, fixed_abs, tag = 'smem constant byte address 0x4 - core index']
  #allocation1 [shape = 'u32[72,128]{1,0:T(1,128)}', space=vmem, size = 0x9000, scoped, tag = 'internal scratch']
  #allocation2 [shape = 'f32[4,88,128]{2,1,0:T(8,128)}', space=vmem, size = 0x2c000, scoped, tag = 'scratch operand']
  #allocation3 [shape = 'f32[72,128]{1,0:T(8,128)}', space=vmem, size = 0x9000, scoped, tag = 'scratch operand']
  %s0 = inlined_call_operand.vmem [shape: f32[8,88,8], index: 0, kind: input, shape index: {}]
  %s1 = inlined_call_operand.vmem [shape: f32[4,88,1], index: 1, kind: input, shape index: {}]
  %s2 = inlined_call_operand.vmem [shape: f32[8,128], index: 2, kind: input, shape index: {}]
  %s3 = inlined_call_operand.vmem [shape: f32[1,128], index: 3, kind: input, shape index: {}]
  %s4 = inlined_call_operand.hbm [shape: f32[9,128,128], index: 4, kind: input, shape index: {}]
  %s5 = inlined_call_operand.vmem [shape: f32[1,128], index: 5, kind: input, shape index: {}]
  %s6 = inlined_call_operand.hbm [shape: f32[2,72,128], index: 6, kind: output, shape index: {}]
  %s7 = sld [smem:[#allocation0]]
  $region61: #{tpu_custom_call.1} parent=0
    _
  %s9 = ssub.s32 1, %s7
  %s10 = scalar_select 0, %s9, %s7
  $region1: #{tpu_custom_call.1} parent=0
    #allocation4 [shape = 'u8[589824]{0}', space=vmem, size = 0x90000, scoped, tag = 'input window, operand 4, single buffered']
    #allocation5 [shape = 's32[2]{0}', space=sflag, size = 0x8, scoped, tag = 'scoped memory for tpu_custom_call.1']
    #allocation6 [shape = 's32[2]{0}', space=sflag, size = 0x8, scoped, tag = 'scoped memory for tpu_custom_call.1']
    #allocation7 [shape = 'u8[73728]{0}', space=vmem, size = 0x12000, scoped, tag = 'output window, operand 0']
    %11 = vsyncpa [#allocation5], 0
    %12 = vsyncpa [#allocation6], 0
    %s13 = scalar_lea.sflag [#allocation6], 1
    %14 = vsyncpa %s13, 0
    loop: start=0, step=1, limit=4
    $region2: #{tpu_custom_call.1} parent=1 // loop_pre_header
      _
    $region3: #{tpu_custom_call.1} parent=1 // loop_header
      %s16 = sphi 0, %s20
      %p17 = scmp.ge.s32.totalorder %s16, 4
      %s23 = sphi 0, %s35
      %s24 = sphi 0, %s31
      %s25 = sphi 0, %s23
      %s26 = sphi 0, %s24
      %s27 = sphi 0, %s25
      %s28 = sphi 0, %s26
      %s38 = sphi 0, %s40
      %s41 = sphi 0, %s38
      %s42 = sphi 0, %s41
      %s58 = sphi 0, %s42
      %s62 = sphi 0, %s62
      %s64 = sphi 0, %s62
      %s65 = sphi 0, %s64
      %s79 = sphi 0, %s65
      %s83 = sphi 0, %s83
      %s85 = sphi 0, %s83
      %s86 = sphi 0, %s85
      %s100 = sphi 0, %s86
      %s104 = sphi 0, %s104
      %s106 = sphi 0, %s104
      %s107 = sphi 0, %s106
      %s121 = sphi 0, %s107
      %s125 = sphi 0, %s125
      %s127 = sphi 0, %s125
      %s128 = sphi 0, %s127
      %s142 = sphi 0, %s128
      %s146 = sphi 0, %s146
      %s148 = sphi 0, %s146
      %s149 = sphi 0, %s148
      %s163 = sphi 0, %s149
      %s171 = sphi 0, %s173
      %s174 = sphi 0, %s171
      %s175 = sphi 0, %s174
      %s191 = sphi 0, %s175
    $region4: #{tpu_custom_call.1} parent=1 // loop_header_branch
      %19 = sbr.rel (%p17) target = $region8
    $region5: #{tpu_custom_call.1} parent=1 // loop_body
      %s21 = ssub.s32 %s16, 1
      %s22 = ssub.s32 %s16, 2
      %s29 = sadd.s32 1, %s24
      %p30 = scmp.ge.s32.totalorder %s29, 1
      %s31 = scalar_select %p30, 0, %s29
      %s32 = sadd.s32 1, %s23
      %s33 = scalar_select %p30, %s32, %s23
      %p34 = scmp.ge.s32.totalorder %s33, 2
      %s35 = scalar_select %p34, 0, %s33
      %s36 = ssub.s32 %s23, %s35
      %p37 = scmp.eq.s32.totalorder %s36, 0
      %s39 = sadd.s32 %s38, 1
      %s40 = scalar_select %p37, %s38, %s39
      %p43 = pneg %p37
      %p44 = scmp.eq.s32.totalorder %s16, 1
      %p45 = por %p43, %p44
      %p46 = scmp.ne.s32.totalorder %s38, %s41
      %p47 = scmp.eq.s32.totalorder %s16, 0
      %p48 = por %p46, %p47
      %p49 = scmp.ne.s32.totalorder %s38, %s41
      %p50 = scmp.eq.s32.totalorder %s21, 1
      %p51 = por %p49, %p50
      %p52 = scmp.ne.s32.totalorder %s41, %s42
      %p53 = scmp.eq.s32.totalorder %s21, 0
      %p54 = por %p52, %p53
      %p55 = scmp.ne.s32.totalorder %s41, %s42
      %p56 = scmp.eq.s32.totalorder %s22, 1
      %p57 = por %p55, %p56
      %p59 = scmp.ne.s32.totalorder %s42, %s58
      %p60 = scmp.eq.s32.totalorder %s22, 0
      %p61 = por %p59, %p60
      %s63 = sadd.s32 %s62, 1
      %p66 = scmp.eq.s32.totalorder %s16, 1
      %p67 = scmp.ne.s32.totalorder %s62, %s64
      %p68 = scmp.eq.s32.totalorder %s16, 0
      %p69 = por %p67, %p68
      %p70 = scmp.ne.s32.totalorder %s62, %s64
      %p71 = scmp.eq.s32.totalorder %s21, 1
      %p72 = por %p70, %p71
      %p73 = scmp.ne.s32.totalorder %s64, %s65
      %p74 = scmp.eq.s32.totalorder %s21, 0
      %p75 = por %p73, %p74
      %p76 = scmp.ne.s32.totalorder %s64, %s65
      %p77 = scmp.eq.s32.totalorder %s22, 1
      %p78 = por %p76, %p77
      %p80 = scmp.ne.s32.totalorder %s65, %s79
      %p81 = scmp.eq.s32.totalorder %s22, 0
      %p82 = por %p80, %p81
      %s84 = sadd.s32 %s83, 1
      %p87 = scmp.eq.s32.totalorder %s16, 1
      %p88 = scmp.ne.s32.totalorder %s83, %s85
      %p89 = scmp.eq.s32.totalorder %s16, 0
      %p90 = por %p88, %p89
      %p91 = scmp.ne.s32.totalorder %s83, %s85
      %p92 = scmp.eq.s32.totalorder %s21, 1
      %p93 = por %p91, %p92
      %p94 = scmp.ne.s32.totalorder %s85, %s86
      %p95 = scmp.eq.s32.totalorder %s21, 0
      %p96 = por %p94, %p95
      %p97 = scmp.ne.s32.totalorder %s85, %s86
      %p98 = scmp.eq.s32.totalorder %s22, 1
      %p99 = por %p97, %p98
      %p101 = scmp.ne.s32.totalorder %s86, %s100
      %p102 = scmp.eq.s32.totalorder %s22, 0
      %p103 = por %p101, %p102
      %s105 = sadd.s32 %s104, 1
      %p108 = scmp.eq.s32.totalorder %s16, 1
      %p109 = scmp.ne.s32.totalorder %s104, %s106
      %p110 = scmp.eq.s32.totalorder %s16, 0
      %p111 = por %p109, %p110
      %p112 = scmp.ne.s32.totalorder %s104, %s106
      %p113 = scmp.eq.s32.totalorder %s21, 1
      %p114 = por %p112, %p113
      %p115 = scmp.ne.s32.totalorder %s106, %s107
      %p116 = scmp.eq.s32.totalorder %s21, 0
      %p117 = por %p115, %p116
      %p118 = scmp.ne.s32.totalorder %s106, %s107
      %p119 = scmp.eq.s32.totalorder %s22, 1
      %p120 = por %p118, %p119
      %p122 = scmp.ne.s32.totalorder %s107, %s121
      %p123 = scmp.eq.s32.totalorder %s22, 0
      %p124 = por %p122, %p123
      %s126 = sadd.s32 %s125, 1
      %p129 = scmp.eq.s32.totalorder %s16, 1
      %p130 = scmp.ne.s32.totalorder %s125, %s127
      %p131 = scmp.eq.s32.totalorder %s16, 0
      %p132 = por %p130, %p131
      %p133 = scmp.ne.s32.totalorder %s125, %s127
      %p134 = scmp.eq.s32.totalorder %s21, 1
      %p135 = por %p133, %p134
      %p136 = scmp.ne.s32.totalorder %s127, %s128
      %p137 = scmp.eq.s32.totalorder %s21, 0
      %p138 = por %p136, %p137
      %p139 = scmp.ne.s32.totalorder %s127, %s128
      %p140 = scmp.eq.s32.totalorder %s22, 1
      %p141 = por %p139, %p140
      %p143 = scmp.ne.s32.totalorder %s128, %s142
      %p144 = scmp.eq.s32.totalorder %s22, 0
      %p145 = por %p143, %p144
      %s147 = sadd.s32 %s146, 1
      %p150 = scmp.eq.s32.totalorder %s16, 1
      %p151 = scmp.ne.s32.totalorder %s146, %s148
      %p152 = scmp.eq.s32.totalorder %s16, 0
      %p153 = por %p151, %p152
      %p154 = scmp.ne.s32.totalorder %s146, %s148
      %p155 = scmp.eq.s32.totalorder %s21, 1
      %p156 = por %p154, %p155
      %p157 = scmp.ne.s32.totalorder %s148, %s149
      %p158 = scmp.eq.s32.totalorder %s21, 0
      %p159 = por %p157, %p158
      %p160 = scmp.ne.s32.totalorder %s148, %s149
      %p161 = scmp.eq.s32.totalorder %s22, 1
      %p162 = por %p160, %p161
      %p164 = scmp.ne.s32.totalorder %s149, %s163
      %p165 = scmp.eq.s32.totalorder %s22, 0
      %p166 = por %p164, %p165
      %s167 = ssub.s32 %s23, %s35
      %s168 = ssub.s32 %s24, %s31
      %s169 = sor.u32 %s167, %s168
      %p170 = scmp.eq.s32.totalorder %s169, 0
      %s172 = sadd.s32 %s171, 1
      %s173 = scalar_select %p170, %s171, %s172
      %p176 = pneg %p170
      %p177 = scmp.eq.s32.totalorder %s16, 1
      %p178 = por %p176, %p177
      %p179 = scmp.ne.s32.totalorder %s171, %s174
      %p180 = scmp.eq.s32.totalorder %s16, 0
      %p181 = por %p179, %p180
      %p182 = scmp.ne.s32.totalorder %s171, %s174
      %p183 = scmp.eq.s32.totalorder %s21, 1
      %p184 = por %p182, %p183
      %p185 = scmp.ne.s32.totalorder %s174, %s175
      %p186 = scmp.eq.s32.totalorder %s21, 0
      %p187 = por %p185, %p186
      %p188 = scmp.ne.s32.totalorder %s174, %s175
      %p189 = scmp.eq.s32.totalorder %s22, 1
      %p190 = por %p188, %p189
      %p192 = scmp.ne.s32.totalorder %s175, %s191
      %p193 = scmp.eq.s32.totalorder %s22, 0
      %p194 = por %p192, %p193
      %p195 = scmp.le.s32.totalorder 1, %s16
      %p196 = scmp.lt.s32.totalorder %s16, 3
      %p197 = pnand %p195, %p196
      %p198 = pneg %p197
      // Predicated region
      $region9: #{tpu_custom_call.1} parent=5 // pred_check
        _
      $region10: #{tpu_custom_call.1} parent=5 // pred_check_branch
        %200 = sbr.rel (%p197) target = $region12
      $region11: #{tpu_custom_call.1} parent=5 // pred_region
        %s201 = ssub.s32 %s16, 1
        // Predicated region
        $region13: #{tpu_custom_call.1} parent=11 // pred_check
          %p202 = pneg %p75
        $region14: #{tpu_custom_call.1} parent=11 // pred_check_branch
          %204 = sbr.rel (%p202) target = $region16
        $region15: #{tpu_custom_call.1} parent=11 // pred_region
          _
        $region16: #{tpu_custom_call.1} parent=11 // pred_fallthru
          _
        // Predicated region
        $region17: #{tpu_custom_call.1} parent=11 // pred_check
          %p205 = pneg %p96
        $region18: #{tpu_custom_call.1} parent=11 // pred_check_branch
          %207 = sbr.rel (%p205) target = $region20
        $region19: #{tpu_custom_call.1} parent=11 // pred_region
          _
        $region20: #{tpu_custom_call.1} parent=11 // pred_fallthru
          _
        // Predicated region
        $region21: #{tpu_custom_call.1} parent=11 // pred_check
          %p208 = pneg %p117
        $region22: #{tpu_custom_call.1} parent=11 // pred_check_branch
          %210 = sbr.rel (%p208) target = $region24
        $region23: #{tpu_custom_call.1} parent=11 // pred_region
          _
        $region24: #{tpu_custom_call.1} parent=11 // pred_fallthru
          _
        // Predicated region
        $region25: #{tpu_custom_call.1} parent=11 // pred_check
          %p211 = pneg %p138
        $region26: #{tpu_custom_call.1} parent=11 // pred_check_branch
          %213 = sbr.rel (%p211) target = $region28
        $region27: #{tpu_custom_call.1} parent=11 // pred_region
          %215 = vsyncadd [#allocation5], 0
          %s216 = sshll.u32 %s4, 4
          %s217 = int_to_ptr.hbm [resolvable:$true] %s216
          %s218 = sshll.u32 [#allocation4], 4
          %s219 = int_to_ptr.vmem [resolvable:$true] %s218
          %224 = dma.hbm_to_vmem [thread:$0]  %s217, 18432, %s219, [#allocation5], 128, 128, 8
        $region28: #{tpu_custom_call.1} parent=11 // pred_fallthru
          _
        // Predicated region
        $region29: #{tpu_custom_call.1} parent=11 // pred_check
          %p225 = pneg %p159
        $region30: #{tpu_custom_call.1} parent=11 // pred_check_branch
          %227 = sbr.rel (%p225) target = $region32
        $region31: #{tpu_custom_call.1} parent=11 // pred_region
          _
        $region32: #{tpu_custom_call.1} parent=11 // pred_fallthru
          _
      $region12: #{tpu_custom_call.1} parent=5 // pred_fallthru
        _
      %p228 = scmp.lt.s32.totalorder %s16, 2
      // Predicated region
      $region33: #{tpu_custom_call.1} parent=5 // pred_check
        %p229 = pneg %p228
      $region34: #{tpu_custom_call.1} parent=5 // pred_check_branch
        %231 = sbr.rel (%p229) target = $region36
      $region35: #{tpu_custom_call.1} parent=5 // pred_region
        // Predicated region
        $region37: #{tpu_custom_call.1} parent=35 // pred_check
          %p232 = pneg %p48
        $region38: #{tpu_custom_call.1} parent=35 // pred_check_branch
          %234 = sbr.rel (%p232) target = $region40
        $region39: #{tpu_custom_call.1} parent=35 // pred_region
          %s235 = smul.u32 4, %s23
          %p236 = scmp.lt.s32.totalorder %s235, 7
          %s237 = scalar_select %p236, %s235, 7
          %s238 = smul.addr %s237, 11
          %s239 = smul.addr %s238, 8
          %s240 = scalar_lea.vmem %s0, %s239
          %s241 = smul.u32 4, %s23
        $region40: #{tpu_custom_call.1} parent=35 // pred_fallthru
          _
      $region36: #{tpu_custom_call.1} parent=5 // pred_fallthru
        _
      %p242 = scmp.le.s32.totalorder 1, %s16
      %p243 = scmp.lt.s32.totalorder %s16, 3
      %p244 = pnand %p242, %p243
      %p245 = pneg %p244
      // Predicated region
      $region41: #{tpu_custom_call.1} parent=5 // pred_check
        _
      $region42: #{tpu_custom_call.1} parent=5 // pred_check_branch
        %247 = sbr.rel (%p244) target = $region44
      $region43: #{tpu_custom_call.1} parent=5 // pred_region
        %s248 = ssub.s32 %s16, 1
        // Predicated region
        $region45: #{tpu_custom_call.1} parent=43 // pred_check
          %p249 = pneg %p138
        $region46: #{tpu_custom_call.1} parent=43 // pred_check_branch
          %251 = sbr.rel (%p249) target = $region48
        $region47: #{tpu_custom_call.1} parent=43 // pred_region
          %253 = dma.done [#allocation5], 18432
        $region48: #{tpu_custom_call.1} parent=43 // pred_fallthru
          _
        %s254 = smul.u32 4, %s25
        %p255 = scmp.lt.s32.totalorder %s254, 7
        %s256 = scalar_select %p255, %s254, 7
        %s257 = smul.addr %s256, 11
        %s258 = smul.addr %s257, 8
        %s259 = scalar_lea.vmem %s0, %s258
        %p260 = pneg %p54
        %p261 = pneg %p51
        %p262 = pneg %p75
        %p263 = pneg %p72
        %p264 = pneg %p96
        %p265 = pneg %p93
        %p266 = pneg %p117
        %p267 = pneg %p114
        %p268 = pneg %p138
        %p269 = pneg %p135
        %p270 = pneg %p159
        %p271 = pneg %p156
        %p272 = pneg %p187
        %p273 = pneg %p184
        %s274 = sand.u32 %s174, 1
        %s275 = scalar_lea.sflag [#allocation6], %s274
        %s276 = sand.u32 %s174, 1
        %s277 = smul.addr %s276, 72
        %s278 = scalar_lea.vmem [#allocation7], %s277
        %s279 = smul.u32 4, %s25
        %p280 = scmp.lt.s32.totalorder %s279, 7
        %s281 = scalar_select %p280, %s279, 7
        %s282 = smul.addr %s281, 11
        %s283 = smul.addr %s282, 8
        %s284 = scalar_lea.vmem %s0, %s283
        %s285 = smul.u32 4, %s25
        %s286 = smul.u32 9, %s26
        %s287 = smul.u32 %s26, 72
        %s288 = scalar_lea.vmem %s284, %s287
        %v289 = vld [vmem:[%s288] sm:$0xff]
        %v290 = vld [vmem:[%s288 + $0x8] sm:$0xff]
        %v291 = vld [vmem:[%s288 + $0x10] sm:$0xff]
        %v292 = vld [vmem:[%s288 + $0x18] sm:$0xff]
        %v293 = vld [vmem:[%s288 + $0x20] sm:$0xff]
        %v294 = vld [vmem:[%s288 + $0x28] sm:$0xff]
        %v295 = vld [vmem:[%s288 + $0x30] sm:$0xff]
        %v296 = vld [vmem:[%s288 + $0x38] sm:$0xff]
        %v297 = vld [vmem:[%s288 + $0x40] sm:$0xff]
        %v298 = vld [vmem:[%s288 + $0x48] sm:$0xff]
        %v299 = vld [vmem:[%s288 + $0x50] sm:$0xff]
        %v300 = vld [vmem:[%s2] sm:$0xff]
        %v301 = vld [vmem:[%s3] sm:$0x1]
        %v303 = vperm.slane %v301, 0
        %vm305 = vcmask 64512
        %v307 = vsel %vm305, %v289, 0
        %v310 = vsel %vm305, %v290, 0
        %v313 = vsel %vm305, %v291, 0
        %v316 = vsel %vm305, %v292, 0
        %v319 = vsel %vm305, %v293, 0
        %v322 = vsel %vm305, %v294, 0
        %v325 = vsel %vm305, %v295, 0
        %v328 = vsel %vm305, %v296, 0
        %v331 = vsel %vm305, %v297, 0
        %v334 = vsel %vm305, %v298, 0
        %v337 = vsel %vm305, %v299, 0
        %339 = vmatpush.msra.mxu0 0.0
        %340 = vmatpush.msra.mxu0 0.0
        %341 = vmatpush.msra.mxu0 0.0
        %342 = vmatpush.msra.mxu0 0.0
        %343 = vmatpush.msra.mxu0 0.0
        %344 = vmatpush.msra.mxu0 0.0
        %345 = vmatpush.msra.mxu0 0.0
        %346 = vmatpush.msra.mxu0 0.0
        %347 = vmatpush.msra.mxu0 0.0
        %348 = vmatpush.msra.mxu0 0.0
        %349 = vmatpush.msra.mxu0 0.0
        %350 = vmatpush.msra.mxu0 0.0
        %351 = vmatpush.msra.mxu0 0.0
        %352 = vmatpush.msra.mxu0 0.0
        %353 = vmatpush.msra.mxu0 0.0
        %354 = vmatpush.msra.mxu0 %v300
        %355 = vmatmul.f32.gmra.mxu0 %v307
        %v356 = vpop.f32.mrf.mxu0
        %v357 = vadd.f32 %v303, %v356
        %358 = vmatmul.f32.gmra.mxu0 %v310
        %v359 = vpop.f32.mrf.mxu0
        %v360 = vadd.f32 %v303, %v359
        %361 = vmatmul.f32.gmra.mxu0 %v313
        %v362 = vpop.f32.mrf.mxu0
        %v363 = vadd.f32 %v303, %v362
        %364 = vmatmul.f32.gmra.mxu0 %v316
        %v365 = vpop.f32.mrf.mxu0
        %v366 = vadd.f32 %v303, %v365
        %367 = vmatmul.f32.gmra.mxu0 %v319
        %v368 = vpop.f32.mrf.mxu0
        %v369 = vadd.f32 %v303, %v368
        %370 = vmatmul.f32.gmra.mxu0 %v322
        %v371 = vpop.f32.mrf.mxu0
        %v372 = vadd.f32 %v303, %v371
        %373 = vmatmul.f32.gmra.mxu0 %v325
        %v374 = vpop.f32.mrf.mxu0
        %v375 = vadd.f32 %v303, %v374
        %376 = vmatmul.f32.gmra.mxu0 %v328
        %v377 = vpop.f32.mrf.mxu0
        %v378 = vadd.f32 %v303, %v377
        %379 = vmatmul.f32.gmra.mxu0 %v331
        %v380 = vpop.f32.mrf.mxu0
        %v381 = vadd.f32 %v303, %v380
        %382 = vmatmul.f32.gmra.mxu0 %v334
        %v383 = vpop.f32.mrf.mxu0
        %v384 = vadd.f32 %v303, %v383
        %385 = vmatmul.f32.gmra.mxu0 %v337
        %v386 = vpop.f32.mrf.mxu0
        %v387 = vadd.f32 %v303, %v386
        %388 = vdwg.mxu0
        %v389 = vmax.f32 %v357, 0.0
        %v390 = vmax.f32 %v360, 0.0
        %v391 = vmax.f32 %v363, 0.0
        %v392 = vmax.f32 %v366, 0.0
        %v393 = vmax.f32 %v369, 0.0
        %v394 = vmax.f32 %v372, 0.0
        %v395 = vmax.f32 %v375, 0.0
        %v396 = vmax.f32 %v378, 0.0
        %v397 = vmax.f32 %v381, 0.0
        %v398 = vmax.f32 %v384, 0.0
        %v399 = vmax.f32 %v387, 0.0
        %s400 = scalar_lea.vmem %s1, %s287
        %v401 = vld [vmem:[%s400] sm:$0xff]
        %v402 = vld [vmem:[%s400 + $0x8] sm:$0xff]
        %v403 = vld [vmem:[%s400 + $0x10] sm:$0xff]
        %v404 = vld [vmem:[%s400 + $0x18] sm:$0xff]
        %v405 = vld [vmem:[%s400 + $0x20] sm:$0xff]
        %v406 = vld [vmem:[%s400 + $0x28] sm:$0xff]
        %v407 = vld [vmem:[%s400 + $0x30] sm:$0xff]
        %v408 = vld [vmem:[%s400 + $0x38] sm:$0xff]
        %v409 = vld [vmem:[%s400 + $0x40] sm:$0xff]
        %v410 = vld [vmem:[%s400 + $0x48] sm:$0xff]
        %v411 = vld [vmem:[%s400 + $0x50] sm:$0xff]
        %413 = vset.pattern.permute.xlu0 0
        %414 = vperm.xlu0 %413, %v401
        %v415 = vpop.permute.xlu0 %414
        %418 = vset.pattern.permute.xlu0 0
        %419 = vperm.xlu0 %418, %v402
        %v420 = vpop.permute.xlu0 %419
        %423 = vset.pattern.permute.xlu0 0
        %424 = vperm.xlu0 %423, %v403
        %v425 = vpop.permute.xlu0 %424
        %428 = vset.pattern.permute.xlu0 0
        %429 = vperm.xlu0 %428, %v404
        %v430 = vpop.permute.xlu0 %429
        %433 = vset.pattern.permute.xlu0 0
        %434 = vperm.xlu0 %433, %v405
        %v435 = vpop.permute.xlu0 %434
        %438 = vset.pattern.permute.xlu0 0
        %439 = vperm.xlu0 %438, %v406
        %v440 = vpop.permute.xlu0 %439
        %443 = vset.pattern.permute.xlu0 0
        %444 = vperm.xlu0 %443, %v407
        %v445 = vpop.permute.xlu0 %444
        %448 = vset.pattern.permute.xlu0 0
        %449 = vperm.xlu0 %448, %v408
        %v450 = vpop.permute.xlu0 %449
        %453 = vset.pattern.permute.xlu0 0
        %454 = vperm.xlu0 %453, %v409
        %v455 = vpop.permute.xlu0 %454
        %458 = vset.pattern.permute.xlu0 0
        %459 = vperm.xlu0 %458, %v410
        %v460 = vpop.permute.xlu0 %459
        %463 = vset.pattern.permute.xlu0 0
        %464 = vperm.xlu0 %463, %v411
        %v465 = vpop.permute.xlu0 %464
        %v467 = vmul.f32 %v389, %v415
        %v468 = vmul.f32 %v390, %v420
        %v469 = vmul.f32 %v391, %v425
        %v470 = vmul.f32 %v392, %v430
        %v471 = vmul.f32 %v393, %v435
        %v472 = vmul.f32 %v394, %v440
        %v473 = vmul.f32 %v395, %v445
        %v474 = vmul.f32 %v396, %v450
        %v475 = vmul.f32 %v397, %v455
        %v476 = vmul.f32 %v398, %v460
        %v477 = vmul.f32 %v399, %v465
        %478 = vst [vmem:[#allocation2] sm:$0xff] %v467
        %479 = vst [vmem:[#allocation2 + $0x8] sm:$0xff] %v468
        %480 = vst [vmem:[#allocation2 + $0x10] sm:$0xff] %v469
        %481 = vst [vmem:[#allocation2 + $0x18] sm:$0xff] %v470
        %482 = vst [vmem:[#allocation2 + $0x20] sm:$0xff] %v471
        %483 = vst [vmem:[#allocation2 + $0x28] sm:$0xff] %v472
        %484 = vst [vmem:[#allocation2 + $0x30] sm:$0xff] %v473
        %485 = vst [vmem:[#allocation2 + $0x38] sm:$0xff] %v474
        %486 = vst [vmem:[#allocation2 + $0x40] sm:$0xff] %v475
        %487 = vst [vmem:[#allocation2 + $0x48] sm:$0xff] %v476
        %488 = vst [vmem:[#allocation2 + $0x50] sm:$0xff] %v477
        %s489 = sadd.s32 %s287, 88
        %s490 = scalar_lea.vmem %s284, %s489
        %v491 = vld [vmem:[%s490] sm:$0xff]
        %v492 = vld [vmem:[%s490 + $0x8] sm:$0xff]
        %v493 = vld [vmem:[%s490 + $0x10] sm:$0xff]
        %v494 = vld [vmem:[%s490 + $0x18] sm:$0xff]
        %v495 = vld [vmem:[%s490 + $0x20] sm:$0xff]
        %v496 = vld [vmem:[%s490 + $0x28] sm:$0xff]
        %v497 = vld [vmem:[%s490 + $0x30] sm:$0xff]
        %v498 = vld [vmem:[%s490 + $0x38] sm:$0xff]
        %v499 = vld [vmem:[%s490 + $0x40] sm:$0xff]
        %v500 = vld [vmem:[%s490 + $0x48] sm:$0xff]
        %v501 = vld [vmem:[%s490 + $0x50] sm:$0xff]
        %v502 = vld [vmem:[%s2] sm:$0xff]
        %v503 = vld [vmem:[%s3] sm:$0x1]
        %v505 = vperm.slane %v503, 0
        %v508 = vsel %vm305, %v491, 0
        %v511 = vsel %vm305, %v492, 0
        %v514 = vsel %vm305, %v493, 0
        %v517 = vsel %vm305, %v494, 0
        %v520 = vsel %vm305, %v495, 0
        %v523 = vsel %vm305, %v496, 0
        %v526 = vsel %vm305, %v497, 0
        %v529 = vsel %vm305, %v498, 0
        %v532 = vsel %vm305, %v499, 0
        %v535 = vsel %vm305, %v500, 0
        %v538 = vsel %vm305, %v501, 0
        %540 = vmatpush.msra.mxu0 0.0
        %541 = vmatpush.msra.mxu0 0.0
        %542 = vmatpush.msra.mxu0 0.0
        %543 = vmatpush.msra.mxu0 0.0
        %544 = vmatpush.msra.mxu0 0.0
        %545 = vmatpush.msra.mxu0 0.0
        %546 = vmatpush.msra.mxu0 0.0
        %547 = vmatpush.msra.mxu0 0.0
        %548 = vmatpush.msra.mxu0 0.0
        %549 = vmatpush.msra.mxu0 0.0
        %550 = vmatpush.msra.mxu0 0.0
        %551 = vmatpush.msra.mxu0 0.0
        %552 = vmatpush.msra.mxu0 0.0
        %553 = vmatpush.msra.mxu0 0.0
        %554 = vmatpush.msra.mxu0 0.0
        %555 = vmatpush.msra.mxu0 %v502
        %556 = vmatmul.f32.gmra.mxu0 %v508
        %v557 = vpop.f32.mrf.mxu0
        %v558 = vadd.f32 %v505, %v557
        %559 = vmatmul.f32.gmra.mxu0 %v511
        %v560 = vpop.f32.mrf.mxu0
        %v561 = vadd.f32 %v505, %v560
        %562 = vmatmul.f32.gmra.mxu0 %v514
        %v563 = vpop.f32.mrf.mxu0
        %v564 = vadd.f32 %v505, %v563
        %565 = vmatmul.f32.gmra.mxu0 %v517
        %v566 = vpop.f32.mrf.mxu0
        %v567 = vadd.f32 %v505, %v566
        %568 = vmatmul.f32.gmra.mxu0 %v520
        %v569 = vpop.f32.mrf.mxu0
        %v570 = vadd.f32 %v505, %v569
        %571 = vmatmul.f32.gmra.mxu0 %v523
        %v572 = vpop.f32.mrf.mxu0
        %v573 = vadd.f32 %v505, %v572
        %574 = vmatmul.f32.gmra.mxu0 %v526
        %v575 = vpop.f32.mrf.mxu0
        %v576 = vadd.f32 %v505, %v575
        %577 = vmatmul.f32.gmra.mxu0 %v529
        %v578 = vpop.f32.mrf.mxu0
        %v579 = vadd.f32 %v505, %v578
        %580 = vmatmul.f32.gmra.mxu0 %v532
        %v581 = vpop.f32.mrf.mxu0
        %v582 = vadd.f32 %v505, %v581
        %583 = vmatmul.f32.gmra.mxu0 %v535
        %v584 = vpop.f32.mrf.mxu0
        %v585 = vadd.f32 %v505, %v584
        %586 = vmatmul.f32.gmra.mxu0 %v538
        %v587 = vpop.f32.mrf.mxu0
        %v588 = vadd.f32 %v505, %v587
        %589 = vdwg.mxu0
        %v590 = vmax.f32 %v558, 0.0
        %v591 = vmax.f32 %v561, 0.0
        %v592 = vmax.f32 %v564, 0.0
        %v593 = vmax.f32 %v567, 0.0
        %v594 = vmax.f32 %v570, 0.0
        %v595 = vmax.f32 %v573, 0.0
        %v596 = vmax.f32 %v576, 0.0
        %v597 = vmax.f32 %v579, 0.0
        %v598 = vmax.f32 %v582, 0.0
        %v599 = vmax.f32 %v585, 0.0
        %v600 = vmax.f32 %v588, 0.0
        %s601 = scalar_lea.vmem %s1, %s489
        %v602 = vld [vmem:[%s601] sm:$0xff]
        %v603 = vld [vmem:[%s601 + $0x8] sm:$0xff]
        %v604 = vld [vmem:[%s601 + $0x10] sm:$0xff]
        %v605 = vld [vmem:[%s601 + $0x18] sm:$0xff]
        %v606 = vld [vmem:[%s601 + $0x20] sm:$0xff]
        %v607 = vld [vmem:[%s601 + $0x28] sm:$0xff]
        %v608 = vld [vmem:[%s601 + $0x30] sm:$0xff]
        %v609 = vld [vmem:[%s601 + $0x38] sm:$0xff]
        %v610 = vld [vmem:[%s601 + $0x40] sm:$0xff]
        %v611 = vld [vmem:[%s601 + $0x48] sm:$0xff]
        %v612 = vld [vmem:[%s601 + $0x50] sm:$0xff]
        %614 = vset.pattern.permute.xlu0 0
        %615 = vperm.xlu0 %614, %v602
        %v616 = vpop.permute.xlu0 %615
        %619 = vset.pattern.permute.xlu0 0
        %620 = vperm.xlu0 %619, %v603
        %v621 = vpop.permute.xlu0 %620
        %624 = vset.pattern.permute.xlu0 0
        %625 = vperm.xlu0 %624, %v604
        %v626 = vpop.permute.xlu0 %625
        %629 = vset.pattern.permute.xlu0 0
        %630 = vperm.xlu0 %629, %v605
        %v631 = vpop.permute.xlu0 %630
        %634 = vset.pattern.permute.xlu0 0
        %635 = vperm.xlu0 %634, %v606
        %v636 = vpop.permute.xlu0 %635
        %639 = vset.pattern.permute.xlu0 0
        %640 = vperm.xlu0 %639, %v607
        %v641 = vpop.permute.xlu0 %640
        %644 = vset.pattern.permute.xlu0 0
        %645 = vperm.xlu0 %644, %v608
        %v646 = vpop.permute.xlu0 %645
        %649 = vset.pattern.permute.xlu0 0
        %650 = vperm.xlu0 %649, %v609
        %v651 = vpop.permute.xlu0 %650
        %654 = vset.pattern.permute.xlu0 0
        %655 = vperm.xlu0 %654, %v610
        %v656 = vpop.permute.xlu0 %655
        %659 = vset.pattern.permute.xlu0 0
        %660 = vperm.xlu0 %659, %v611
        %v661 = vpop.permute.xlu0 %660
        %664 = vset.pattern.permute.xlu0 0
        %665 = vperm.xlu0 %664, %v612
        %v666 = vpop.permute.xlu0 %665
        %v668 = vmul.f32 %v590, %v616
        %v669 = vmul.f32 %v591, %v621
        %v670 = vmul.f32 %v592, %v626
        %v671 = vmul.f32 %v593, %v631
        %v672 = vmul.f32 %v594, %v636
        %v673 = vmul.f32 %v595, %v641
        %v674 = vmul.f32 %v596, %v646
        %v675 = vmul.f32 %v597, %v651
        %v676 = vmul.f32 %v598, %v656
        %v677 = vmul.f32 %v599, %v661
        %v678 = vmul.f32 %v600, %v666
        %s679 = scalar_lea.vmem [#allocation2], 88
        %680 = vst [vmem:[%s679] sm:$0xff] %v668
        %681 = vst [vmem:[%s679 + $0x8] sm:$0xff] %v669
        %682 = vst [vmem:[%s679 + $0x10] sm:$0xff] %v670
        %683 = vst [vmem:[%s679 + $0x18] sm:$0xff] %v671
        %684 = vst [vmem:[%s679 + $0x20] sm:$0xff] %v672
        %685 = vst [vmem:[%s679 + $0x28] sm:$0xff] %v673
        %686 = vst [vmem:[%s679 + $0x30] sm:$0xff] %v674
        %687 = vst [vmem:[%s679 + $0x38] sm:$0xff] %v675
        %688 = vst [vmem:[%s679 + $0x40] sm:$0xff] %v676
        %689 = vst [vmem:[%s679 + $0x48] sm:$0xff] %v677
        %690 = vst [vmem:[%s679 + $0x50] sm:$0xff] %v678
        %s691 = sadd.s32 %s287, 176
        %s692 = scalar_lea.vmem %s284, %s691
        %v693 = vld [vmem:[%s692] sm:$0xff]
        %v694 = vld [vmem:[%s692 + $0x8] sm:$0xff]
        %v695 = vld [vmem:[%s692 + $0x10] sm:$0xff]
        %v696 = vld [vmem:[%s692 + $0x18] sm:$0xff]
        %v697 = vld [vmem:[%s692 + $0x20] sm:$0xff]
        %v698 = vld [vmem:[%s692 + $0x28] sm:$0xff]
        %v699 = vld [vmem:[%s692 + $0x30] sm:$0xff]
        %v700 = vld [vmem:[%s692 + $0x38] sm:$0xff]
        %v701 = vld [vmem:[%s692 + $0x40] sm:$0xff]
        %v702 = vld [vmem:[%s692 + $0x48] sm:$0xff]
        %v703 = vld [vmem:[%s692 + $0x50] sm:$0xff]
        %v704 = vld [vmem:[%s2] sm:$0xff]
        %v705 = vld [vmem:[%s3] sm:$0x1]
        %v707 = vperm.slane %v705, 0
        %v710 = vsel %vm305, %v693, 0
        %v713 = vsel %vm305, %v694, 0
        %v716 = vsel %vm305, %v695, 0
        %v719 = vsel %vm305, %v696, 0
        %v722 = vsel %vm305, %v697, 0
        %v725 = vsel %vm305, %v698, 0
        %v728 = vsel %vm305, %v699, 0
        %v731 = vsel %vm305, %v700, 0
        %v734 = vsel %vm305, %v701, 0
        %v737 = vsel %vm305, %v702, 0
        %v740 = vsel %vm305, %v703, 0
        %742 = vmatpush.msra.mxu0 0.0
        %743 = vmatpush.msra.mxu0 0.0
        %744 = vmatpush.msra.mxu0 0.0
        %745 = vmatpush.msra.mxu0 0.0
        %746 = vmatpush.msra.mxu0 0.0
        %747 = vmatpush.msra.mxu0 0.0
        %748 = vmatpush.msra.mxu0 0.0
        %749 = vmatpush.msra.mxu0 0.0
        %750 = vmatpush.msra.mxu0 0.0
        %751 = vmatpush.msra.mxu0 0.0
        %752 = vmatpush.msra.mxu0 0.0
        %753 = vmatpush.msra.mxu0 0.0
        %754 = vmatpush.msra.mxu0 0.0
        %755 = vmatpush.msra.mxu0 0.0
        %756 = vmatpush.msra.mxu0 0.0
        %757 = vmatpush.msra.mxu0 %v704
        %758 = vmatmul.f32.gmra.mxu0 %v710
        %v759 = vpop.f32.mrf.mxu0
        %v760 = vadd.f32 %v707, %v759
        %761 = vmatmul.f32.gmra.mxu0 %v713
        %v762 = vpop.f32.mrf.mxu0
        %v763 = vadd.f32 %v707, %v762
        %764 = vmatmul.f32.gmra.mxu0 %v716
        %v765 = vpop.f32.mrf.mxu0
        %v766 = vadd.f32 %v707, %v765
        %767 = vmatmul.f32.gmra.mxu0 %v719
        %v768 = vpop.f32.mrf.mxu0
        %v769 = vadd.f32 %v707, %v768
        %770 = vmatmul.f32.gmra.mxu0 %v722
        %v771 = vpop.f32.mrf.mxu0
        %v772 = vadd.f32 %v707, %v771
        %773 = vmatmul.f32.gmra.mxu0 %v725
        %v774 = vpop.f32.mrf.mxu0
        %v775 = vadd.f32 %v707, %v774
        %776 = vmatmul.f32.gmra.mxu0 %v728
        %v777 = vpop.f32.mrf.mxu0
        %v778 = vadd.f32 %v707, %v777
        %779 = vmatmul.f32.gmra.mxu0 %v731
        %v780 = vpop.f32.mrf.mxu0
        %v781 = vadd.f32 %v707, %v780
        %782 = vmatmul.f32.gmra.mxu0 %v734
        %v783 = vpop.f32.mrf.mxu0
        %v784 = vadd.f32 %v707, %v783
        %785 = vmatmul.f32.gmra.mxu0 %v737
        %v786 = vpop.f32.mrf.mxu0
        %v787 = vadd.f32 %v707, %v786
        %788 = vmatmul.f32.gmra.mxu0 %v740
        %v789 = vpop.f32.mrf.mxu0
        %v790 = vadd.f32 %v707, %v789
        %791 = vdwg.mxu0
        %v792 = vmax.f32 %v760, 0.0
        %v793 = vmax.f32 %v763, 0.0
        %v794 = vmax.f32 %v766, 0.0
        %v795 = vmax.f32 %v769, 0.0
        %v796 = vmax.f32 %v772, 0.0
        %v797 = vmax.f32 %v775, 0.0
        %v798 = vmax.f32 %v778, 0.0
        %v799 = vmax.f32 %v781, 0.0
        %v800 = vmax.f32 %v784, 0.0
        %v801 = vmax.f32 %v787, 0.0
        %v802 = vmax.f32 %v790, 0.0
        %s803 = scalar_lea.vmem %s1, %s691
        %v804 = vld [vmem:[%s803] sm:$0xff]
        %v805 = vld [vmem:[%s803 + $0x8] sm:$0xff]
        %v806 = vld [vmem:[%s803 + $0x10] sm:$0xff]
        %v807 = vld [vmem:[%s803 + $0x18] sm:$0xff]
        %v808 = vld [vmem:[%s803 + $0x20] sm:$0xff]
        %v809 = vld [vmem:[%s803 + $0x28] sm:$0xff]
        %v810 = vld [vmem:[%s803 + $0x30] sm:$0xff]
        %v811 = vld [vmem:[%s803 + $0x38] sm:$0xff]
        %v812 = vld [vmem:[%s803 + $0x40] sm:$0xff]
        %v813 = vld [vmem:[%s803 + $0x48] sm:$0xff]
        %v814 = vld [vmem:[%s803 + $0x50] sm:$0xff]
        %816 = vset.pattern.permute.xlu0 0
        %817 = vperm.xlu0 %816, %v804
        %v818 = vpop.permute.xlu0 %817
        %821 = vset.pattern.permute.xlu0 0
        %822 = vperm.xlu0 %821, %v805
        %v823 = vpop.permute.xlu0 %822
        %826 = vset.pattern.permute.xlu0 0
        %827 = vperm.xlu0 %826, %v806
        %v828 = vpop.permute.xlu0 %827
        %831 = vset.pattern.permute.xlu0 0
        %832 = vperm.xlu0 %831, %v807
        %v833 = vpop.permute.xlu0 %832
        %836 = vset.pattern.permute.xlu0 0
        %837 = vperm.xlu0 %836, %v808
        %v838 = vpop.permute.xlu0 %837
        %841 = vset.pattern.permute.xlu0 0
        %842 = vperm.xlu0 %841, %v809
        %v843 = vpop.permute.xlu0 %842
        %846 = vset.pattern.permute.xlu0 0
        %847 = vperm.xlu0 %846, %v810
        %v848 = vpop.permute.xlu0 %847
        %851 = vset.pattern.permute.xlu0 0
        %852 = vperm.xlu0 %851, %v811
        %v853 = vpop.permute.xlu0 %852
        %856 = vset.pattern.permute.xlu0 0
        %857 = vperm.xlu0 %856, %v812
        %v858 = vpop.permute.xlu0 %857
        %861 = vset.pattern.permute.xlu0 0
        %862 = vperm.xlu0 %861, %v813
        %v863 = vpop.permute.xlu0 %862
        %866 = vset.pattern.permute.xlu0 0
        %867 = vperm.xlu0 %866, %v814
        %v868 = vpop.permute.xlu0 %867
        %v870 = vmul.f32 %v792, %v818
        %v871 = vmul.f32 %v793, %v823
        %v872 = vmul.f32 %v794, %v828
        %v873 = vmul.f32 %v795, %v833
        %v874 = vmul.f32 %v796, %v838
        %v875 = vmul.f32 %v797, %v843
        %v876 = vmul.f32 %v798, %v848
        %v877 = vmul.f32 %v799, %v853
        %v878 = vmul.f32 %v800, %v858
        %v879 = vmul.f32 %v801, %v863
        %v880 = vmul.f32 %v802, %v868
        %s881 = scalar_lea.vmem [#allocation2], 176
        %882 = vst [vmem:[%s881] sm:$0xff] %v870
        %883 = vst [vmem:[%s881 + $0x8] sm:$0xff] %v871
        %884 = vst [vmem:[%s881 + $0x10] sm:$0xff] %v872
        %885 = vst [vmem:[%s881 + $0x18] sm:$0xff] %v873
        %886 = vst [vmem:[%s881 + $0x20] sm:$0xff] %v874
        %887 = vst [vmem:[%s881 + $0x28] sm:$0xff] %v875
        %888 = vst [vmem:[%s881 + $0x30] sm:$0xff] %v876
        %889 = vst [vmem:[%s881 + $0x38] sm:$0xff] %v877
        %890 = vst [vmem:[%s881 + $0x40] sm:$0xff] %v878
        %891 = vst [vmem:[%s881 + $0x48] sm:$0xff] %v879
        %892 = vst [vmem:[%s881 + $0x50] sm:$0xff] %v880
        %s893 = sadd.s32 %s287, 264
        %s894 = scalar_lea.vmem %s284, %s893
        %v895 = vld [vmem:[%s894] sm:$0xff]
        %v896 = vld [vmem:[%s894 + $0x8] sm:$0xff]
        %v897 = vld [vmem:[%s894 + $0x10] sm:$0xff]
        %v898 = vld [vmem:[%s894 + $0x18] sm:$0xff]
        %v899 = vld [vmem:[%s894 + $0x20] sm:$0xff]
        %v900 = vld [vmem:[%s894 + $0x28] sm:$0xff]
        %v901 = vld [vmem:[%s894 + $0x30] sm:$0xff]
        %v902 = vld [vmem:[%s894 + $0x38] sm:$0xff]
        %v903 = vld [vmem:[%s894 + $0x40] sm:$0xff]
        %v904 = vld [vmem:[%s894 + $0x48] sm:$0xff]
        %v905 = vld [vmem:[%s894 + $0x50] sm:$0xff]
        %v906 = vld [vmem:[%s2] sm:$0xff]
        %v907 = vld [vmem:[%s3] sm:$0x1]
        %v909 = vperm.slane %v907, 0
        %v912 = vsel %vm305, %v895, 0
        %v915 = vsel %vm305, %v896, 0
        %v918 = vsel %vm305, %v897, 0
        %v921 = vsel %vm305, %v898, 0
        %v924 = vsel %vm305, %v899, 0
        %v927 = vsel %vm305, %v900, 0
        %v930 = vsel %vm305, %v901, 0
        %v933 = vsel %vm305, %v902, 0
        %v936 = vsel %vm305, %v903, 0
        %v939 = vsel %vm305, %v904, 0
        %v942 = vsel %vm305, %v905, 0
        %944 = vmatpush.msra.mxu0 0.0
        %945 = vmatpush.msra.mxu0 0.0
        %946 = vmatpush.msra.mxu0 0.0
        %947 = vmatpush.msra.mxu0 0.0
        %948 = vmatpush.msra.mxu0 0.0
        %949 = vmatpush.msra.mxu0 0.0
        %950 = vmatpush.msra.mxu0 0.0
        %951 = vmatpush.msra.mxu0 0.0
        %952 = vmatpush.msra.mxu0 0.0
        %953 = vmatpush.msra.mxu0 0.0
        %954 = vmatpush.msra.mxu0 0.0
        %955 = vmatpush.msra.mxu0 0.0
        %956 = vmatpush.msra.mxu0 0.0
        %957 = vmatpush.msra.mxu0 0.0
        %958 = vmatpush.msra.mxu0 0.0
        %959 = vmatpush.msra.mxu0 %v906
        %960 = vmatmul.f32.gmra.mxu0 %v912
        %v961 = vpop.f32.mrf.mxu0
        %v962 = vadd.f32 %v909, %v961
        %963 = vmatmul.f32.gmra.mxu0 %v915
        %v964 = vpop.f32.mrf.mxu0
        %v965 = vadd.f32 %v909, %v964
        %966 = vmatmul.f32.gmra.mxu0 %v918
        %v967 = vpop.f32.mrf.mxu0
        %v968 = vadd.f32 %v909, %v967
        %969 = vmatmul.f32.gmra.mxu0 %v921
        %v970 = vpop.f32.mrf.mxu0
        %v971 = vadd.f32 %v909, %v970
        %972 = vmatmul.f32.gmra.mxu0 %v924
        %v973 = vpop.f32.mrf.mxu0
        %v974 = vadd.f32 %v909, %v973
        %975 = vmatmul.f32.gmra.mxu0 %v927
        %v976 = vpop.f32.mrf.mxu0
        %v977 = vadd.f32 %v909, %v976
        %978 = vmatmul.f32.gmra.mxu0 %v930
        %v979 = vpop.f32.mrf.mxu0
        %v980 = vadd.f32 %v909, %v979
        %981 = vmatmul.f32.gmra.mxu0 %v933
        %v982 = vpop.f32.mrf.mxu0
        %v983 = vadd.f32 %v909, %v982
        %984 = vmatmul.f32.gmra.mxu0 %v936
        %v985 = vpop.f32.mrf.mxu0
        %v986 = vadd.f32 %v909, %v985
        %987 = vmatmul.f32.gmra.mxu0 %v939
        %v988 = vpop.f32.mrf.mxu0
        %v989 = vadd.f32 %v909, %v988
        %990 = vmatmul.f32.gmra.mxu0 %v942
        %v991 = vpop.f32.mrf.mxu0
        %v992 = vadd.f32 %v909, %v991
        %993 = vdwg.mxu0
        %v994 = vmax.f32 %v962, 0.0
        %v995 = vmax.f32 %v965, 0.0
        %v996 = vmax.f32 %v968, 0.0
        %v997 = vmax.f32 %v971, 0.0
        %v998 = vmax.f32 %v974, 0.0
        %v999 = vmax.f32 %v977, 0.0
        %v1000 = vmax.f32 %v980, 0.0
        %v1001 = vmax.f32 %v983, 0.0
        %v1002 = vmax.f32 %v986, 0.0
        %v1003 = vmax.f32 %v989, 0.0
        %v1004 = vmax.f32 %v992, 0.0
        %s1005 = scalar_lea.vmem %s1, %s893
        %v1006 = vld [vmem:[%s1005] sm:$0xff]
        %v1007 = vld [vmem:[%s1005 + $0x8] sm:$0xff]
        %v1008 = vld [vmem:[%s1005 + $0x10] sm:$0xff]
        %v1009 = vld [vmem:[%s1005 + $0x18] sm:$0xff]
        %v1010 = vld [vmem:[%s1005 + $0x20] sm:$0xff]
        %v1011 = vld [vmem:[%s1005 + $0x28] sm:$0xff]
        %v1012 = vld [vmem:[%s1005 + $0x30] sm:$0xff]
        %v1013 = vld [vmem:[%s1005 + $0x38] sm:$0xff]
        %v1014 = vld [vmem:[%s1005 + $0x40] sm:$0xff]
        %v1015 = vld [vmem:[%s1005 + $0x48] sm:$0xff]
        %v1016 = vld [vmem:[%s1005 + $0x50] sm:$0xff]
        %1018 = vset.pattern.permute.xlu0 0
        %1019 = vperm.xlu0 %1018, %v1006
        %v1020 = vpop.permute.xlu0 %1019
        %1023 = vset.pattern.permute.xlu0 0
        %1024 = vperm.xlu0 %1023, %v1007
        %v1025 = vpop.permute.xlu0 %1024
        %1028 = vset.pattern.permute.xlu0 0
        %1029 = vperm.xlu0 %1028, %v1008
        %v1030 = vpop.permute.xlu0 %1029
        %1033 = vset.pattern.permute.xlu0 0
        %1034 = vperm.xlu0 %1033, %v1009
        %v1035 = vpop.permute.xlu0 %1034
        %1038 = vset.pattern.permute.xlu0 0
        %1039 = vperm.xlu0 %1038, %v1010
        %v1040 = vpop.permute.xlu0 %1039
        %1043 = vset.pattern.permute.xlu0 0
        %1044 = vperm.xlu0 %1043, %v1011
        %v1045 = vpop.permute.xlu0 %1044
        %1048 = vset.pattern.permute.xlu0 0
        %1049 = vperm.xlu0 %1048, %v1012
        %v1050 = vpop.permute.xlu0 %1049
        %1053 = vset.pattern.permute.xlu0 0
        %1054 = vperm.xlu0 %1053, %v1013
        %v1055 = vpop.permute.xlu0 %1054
        %1058 = vset.pattern.permute.xlu0 0
        %1059 = vperm.xlu0 %1058, %v1014
        %v1060 = vpop.permute.xlu0 %1059
        %1063 = vset.pattern.permute.xlu0 0
        %1064 = vperm.xlu0 %1063, %v1015
        %v1065 = vpop.permute.xlu0 %1064
        %1068 = vset.pattern.permute.xlu0 0
        %1069 = vperm.xlu0 %1068, %v1016
        %v1070 = vpop.permute.xlu0 %1069
        %v1072 = vmul.f32 %v994, %v1020
        %v1073 = vmul.f32 %v995, %v1025
        %v1074 = vmul.f32 %v996, %v1030
        %v1075 = vmul.f32 %v997, %v1035
        %v1076 = vmul.f32 %v998, %v1040
        %v1077 = vmul.f32 %v999, %v1045
        %v1078 = vmul.f32 %v1000, %v1050
        %v1079 = vmul.f32 %v1001, %v1055
        %v1080 = vmul.f32 %v1002, %v1060
        %v1081 = vmul.f32 %v1003, %v1065
        %v1082 = vmul.f32 %v1004, %v1070
        %s1083 = scalar_lea.vmem [#allocation2], 264
        %1084 = vst [vmem:[%s1083] sm:$0xff] %v1072
        %1085 = vst [vmem:[%s1083 + $0x8] sm:$0xff] %v1073
        %1086 = vst [vmem:[%s1083 + $0x10] sm:$0xff] %v1074
        %1087 = vst [vmem:[%s1083 + $0x18] sm:$0xff] %v1075
        %1088 = vst [vmem:[%s1083 + $0x20] sm:$0xff] %v1076
        %1089 = vst [vmem:[%s1083 + $0x28] sm:$0xff] %v1077
        %1090 = vst [vmem:[%s1083 + $0x30] sm:$0xff] %v1078
        %1091 = vst [vmem:[%s1083 + $0x38] sm:$0xff] %v1079
        %1092 = vst [vmem:[%s1083 + $0x40] sm:$0xff] %v1080
        %1093 = vst [vmem:[%s1083 + $0x48] sm:$0xff] %v1081
        %1094 = vst [vmem:[%s1083 + $0x50] sm:$0xff] %v1082
        %v1095 = vld [vmem:[#allocation2] sm:$0xff]
        %v1096 = vld [vmem:[#allocation2 + $0x8] sm:$0xff]
        %v1097 = vld [vmem:[#allocation2 + $0x10] sm:$0xff]
        %v1098 = vld [vmem:[#allocation2 + $0x18] sm:$0xff]
        %v1099 = vld [vmem:[#allocation2 + $0x20] sm:$0xff]
        %v1100 = vld [vmem:[#allocation2 + $0x28] sm:$0xff]
        %v1101 = vld [vmem:[#allocation2 + $0x30] sm:$0xff]
        %v1102 = vld [vmem:[#allocation2 + $0x38] sm:$0xff]
        %v1103 = vld [vmem:[#allocation2 + $0x40] sm:$0xff]
        %v1104 = vld [vmem:[#allocation4] sm:$0xff]
        %v1105 = vld [vmem:[#allocation4 + $0x8] sm:$0xff]
        %v1106 = vld [vmem:[#allocation4 + $0x10] sm:$0xff]
        %v1107 = vld [vmem:[#allocation4 + $0x18] sm:$0xff]
        %v1108 = vld [vmem:[#allocation4 + $0x20] sm:$0xff]
        %v1109 = vld [vmem:[#allocation4 + $0x28] sm:$0xff]
        %v1110 = vld [vmem:[#allocation4 + $0x30] sm:$0xff]
        %v1111 = vld [vmem:[#allocation4 + $0x38] sm:$0xff]
        %v1112 = vld [vmem:[#allocation4 + $0x40] sm:$0xff]
        %v1113 = vld [vmem:[#allocation4 + $0x48] sm:$0xff]
        %v1114 = vld [vmem:[#allocation4 + $0x50] sm:$0xff]
        %v1115 = vld [vmem:[#allocation4 + $0x58] sm:$0xff]
        %v1116 = vld [vmem:[#allocation4 + $0x60] sm:$0xff]
        %v1117 = vld [vmem:[#allocation4 + $0x68] sm:$0xff]
        %v1118 = vld [vmem:[#allocation4 + $0x70] sm:$0xff]
        %v1119 = vld [vmem:[#allocation4 + $0x78] sm:$0xff]
        %1120 = vmatpush.msra.mxu0 %v1119
        %1121 = vmatpush.msra.mxu0 %v1118
        %1122 = vmatpush.msra.mxu0 %v1117
        %1123 = vmatpush.msra.mxu0 %v1116
        %1124 = vmatpush.msra.mxu0 %v1115
        %1125 = vmatpush.msra.mxu0 %v1114
        %1126 = vmatpush.msra.mxu0 %v1113
        %1127 = vmatpush.msra.mxu0 %v1112
        %1128 = vmatpush.msra.mxu0 %v1111
        %1129 = vmatpush.msra.mxu0 %v1110
        %1130 = vmatpush.msra.mxu0 %v1109
        %1131 = vmatpush.msra.mxu0 %v1108
        %1132 = vmatpush.msra.mxu0 %v1107
        %1133 = vmatpush.msra.mxu0 %v1106
        %1134 = vmatpush.msra.mxu0 %v1105
        %1135 = vmatpush.msra.mxu0 %v1104
        %1136 = vmatmul.f32.gmra.mxu0 %v1095
        %v1137 = vpop.f32.mrf.mxu0
        %v1138 = vadd.f32 0.0, %v1137
        %1139 = vmatmul.f32.gmra.mxu0 %v1096
        %v1140 = vpop.f32.mrf.mxu0
        %v1141 = vadd.f32 0.0, %v1140
        %1142 = vmatmul.f32.gmra.mxu0 %v1097
        %v1143 = vpop.f32.mrf.mxu0
        %v1144 = vadd.f32 0.0, %v1143
        %1145 = vmatmul.f32.gmra.mxu0 %v1098
        %v1146 = vpop.f32.mrf.mxu0
        %v1147 = vadd.f32 0.0, %v1146
        %1148 = vmatmul.f32.gmra.mxu0 %v1099
        %v1149 = vpop.f32.mrf.mxu0
        %v1150 = vadd.f32 0.0, %v1149
        %1151 = vmatmul.f32.gmra.mxu0 %v1100
        %v1152 = vpop.f32.mrf.mxu0
        %v1153 = vadd.f32 0.0, %v1152
        %1154 = vmatmul.f32.gmra.mxu0 %v1101
        %v1155 = vpop.f32.mrf.mxu0
        %v1156 = vadd.f32 0.0, %v1155
        %1157 = vmatmul.f32.gmra.mxu0 %v1102
        %v1158 = vpop.f32.mrf.mxu0
        %v1159 = vadd.f32 0.0, %v1158
        %1160 = vmatmul.f32.gmra.mxu0 %v1103
        %v1161 = vpop.f32.mrf.mxu0
        %v1162 = vadd.f32 0.0, %v1161
        %1163 = vdwg.mxu0
        %1164 = vst [vmem:[#allocation3] sm:$0xff] %v1138
        %1165 = vst [vmem:[#allocation3 + $0x8] sm:$0xff] %v1141
        %1166 = vst [vmem:[#allocation3 + $0x10] sm:$0xff] %v1144
        %1167 = vst [vmem:[#allocation3 + $0x18] sm:$0xff] %v1147
        %1168 = vst [vmem:[#allocation3 + $0x20] sm:$0xff] %v1150
        %1169 = vst [vmem:[#allocation3 + $0x28] sm:$0xff] %v1153
        %1170 = vst [vmem:[#allocation3 + $0x30] sm:$0xff] %v1156
        %1171 = vst [vmem:[#allocation3 + $0x38] sm:$0xff] %v1159
        %1172 = vst [vmem:[#allocation3 + $0x40] sm:$0xff] %v1162
        %v1173 = vld [vmem:[%s679] sm:$0xff]
        %v1174 = vld [vmem:[%s679 + $0x8] sm:$0xff]
        %v1175 = vld [vmem:[%s679 + $0x10] sm:$0xff]
        %v1176 = vld [vmem:[%s679 + $0x18] sm:$0xff]
        %v1177 = vld [vmem:[%s679 + $0x20] sm:$0xff]
        %v1178 = vld [vmem:[%s679 + $0x28] sm:$0xff]
        %v1179 = vld [vmem:[%s679 + $0x30] sm:$0xff]
        %v1180 = vld [vmem:[%s679 + $0x38] sm:$0xff]
        %v1181 = vld [vmem:[%s679 + $0x40] sm:$0xff]
        %s1182 = scalar_lea.vmem [#allocation4], 128
        %v1183 = vld [vmem:[%s1182] sm:$0xff]
        %v1184 = vld [vmem:[%s1182 + $0x8] sm:$0xff]
        %v1185 = vld [vmem:[%s1182 + $0x10] sm:$0xff]
        %v1186 = vld [vmem:[%s1182 + $0x18] sm:$0xff]
        %v1187 = vld [vmem:[%s1182 + $0x20] sm:$0xff]
        %v1188 = vld [vmem:[%s1182 + $0x28] sm:$0xff]
        %v1189 = vld [vmem:[%s1182 + $0x30] sm:$0xff]
        %v1190 = vld [vmem:[%s1182 + $0x38] sm:$0xff]
        %v1191 = vld [vmem:[%s1182 + $0x40] sm:$0xff]
        %v1192 = vld [vmem:[%s1182 + $0x48] sm:$0xff]
        %v1193 = vld [vmem:[%s1182 + $0x50] sm:$0xff]
        %v1194 = vld [vmem:[%s1182 + $0x58] sm:$0xff]
        %v1195 = vld [vmem:[%s1182 + $0x60] sm:$0xff]
        %v1196 = vld [vmem:[%s1182 + $0x68] sm:$0xff]
        %v1197 = vld [vmem:[%s1182 + $0x70] sm:$0xff]
        %v1198 = vld [vmem:[%s1182 + $0x78] sm:$0xff]
        %1199 = vmatpush.msra.mxu0 %v1198
        %1200 = vmatpush.msra.mxu0 %v1197
        %1201 = vmatpush.msra.mxu0 %v1196
        %1202 = vmatpush.msra.mxu0 %v1195
        %1203 = vmatpush.msra.mxu0 %v1194
        %1204 = vmatpush.msra.mxu0 %v1193
        %1205 = vmatpush.msra.mxu0 %v1192
        %1206 = vmatpush.msra.mxu0 %v1191
        %1207 = vmatpush.msra.mxu0 %v1190
        %1208 = vmatpush.msra.mxu0 %v1189
        %1209 = vmatpush.msra.mxu0 %v1188
        %1210 = vmatpush.msra.mxu0 %v1187
        %1211 = vmatpush.msra.mxu0 %v1186
        %1212 = vmatpush.msra.mxu0 %v1185
        %1213 = vmatpush.msra.mxu0 %v1184
        %1214 = vmatpush.msra.mxu0 %v1183
        %1215 = vmatmul.f32.gmra.mxu0 %v1173
        %v1216 = vpop.f32.mrf.mxu0
        %v1217 = vadd.f32 0.0, %v1216
        %1218 = vmatmul.f32.gmra.mxu0 %v1174
        %v1219 = vpop.f32.mrf.mxu0
        %v1220 = vadd.f32 0.0, %v1219
        %1221 = vmatmul.f32.gmra.mxu0 %v1175
        %v1222 = vpop.f32.mrf.mxu0
        %v1223 = vadd.f32 0.0, %v1222
        %1224 = vmatmul.f32.gmra.mxu0 %v1176
        %v1225 = vpop.f32.mrf.mxu0
        %v1226 = vadd.f32 0.0, %v1225
        %1227 = vmatmul.f32.gmra.mxu0 %v1177
        %v1228 = vpop.f32.mrf.mxu0
        %v1229 = vadd.f32 0.0, %v1228
        %1230 = vmatmul.f32.gmra.mxu0 %v1178
        %v1231 = vpop.f32.mrf.mxu0
        %v1232 = vadd.f32 0.0, %v1231
        %1233 = vmatmul.f32.gmra.mxu0 %v1179
        %v1234 = vpop.f32.mrf.mxu0
        %v1235 = vadd.f32 0.0, %v1234
        %1236 = vmatmul.f32.gmra.mxu0 %v1180
        %v1237 = vpop.f32.mrf.mxu0
        %v1238 = vadd.f32 0.0, %v1237
        %1239 = vmatmul.f32.gmra.mxu0 %v1181
        %v1240 = vpop.f32.mrf.mxu0
        %v1241 = vadd.f32 0.0, %v1240
        %1242 = vdwg.mxu0
        %v1243 = vld [vmem:[#allocation3] sm:$0xff]
        %v1244 = vld [vmem:[#allocation3 + $0x8] sm:$0xff]
        %v1245 = vld [vmem:[#allocation3 + $0x10] sm:$0xff]
        %v1246 = vld [vmem:[#allocation3 + $0x18] sm:$0xff]
        %v1247 = vld [vmem:[#allocation3 + $0x20] sm:$0xff]
        %v1248 = vld [vmem:[#allocation3 + $0x28] sm:$0xff]
        %v1249 = vld [vmem:[#allocation3 + $0x30] sm:$0xff]
        %v1250 = vld [vmem:[#allocation3 + $0x38] sm:$0xff]
        %v1251 = vld [vmem:[#allocation3 + $0x40] sm:$0xff]
        %v1252 = vadd.f32 %v1243, %v1217
        %v1253 = vadd.f32 %v1244, %v1220
        %v1254 = vadd.f32 %v1245, %v1223
        %v1255 = vadd.f32 %v1246, %v1226
        %v1256 = vadd.f32 %v1247, %v1229
        %v1257 = vadd.f32 %v1248, %v1232
        %v1258 = vadd.f32 %v1249, %v1235
        %v1259 = vadd.f32 %v1250, %v1238
        %v1260 = vadd.f32 %v1251, %v1241
        %1261 = vst [vmem:[#allocation3] sm:$0xff] %v1252
        %1262 = vst [vmem:[#allocation3 + $0x8] sm:$0xff] %v1253
        %1263 = vst [vmem:[#allocation3 + $0x10] sm:$0xff] %v1254
        %1264 = vst [vmem:[#allocation3 + $0x18] sm:$0xff] %v1255
        %1265 = vst [vmem:[#allocation3 + $0x20] sm:$0xff] %v1256
        %1266 = vst [vmem:[#allocation3 + $0x28] sm:$0xff] %v1257
        %1267 = vst [vmem:[#allocation3 + $0x30] sm:$0xff] %v1258
        %1268 = vst [vmem:[#allocation3 + $0x38] sm:$0xff] %v1259
        %1269 = vst [vmem:[#allocation3 + $0x40] sm:$0xff] %v1260
        %v1270 = vld [vmem:[#allocation2 + $0x1] sm:$0xff]
        %v1271 = vld [vmem:[#allocation2 + $0x9] sm:$0xff]
        %v1272 = vld [vmem:[#allocation2 + $0x11] sm:$0xff]
        %v1273 = vld [vmem:[#allocation2 + $0x19] sm:$0xff]
        %v1274 = vld [vmem:[#allocation2 + $0x21] sm:$0xff]
        %v1275 = vld [vmem:[#allocation2 + $0x29] sm:$0xff]
        %v1276 = vld [vmem:[#allocation2 + $0x31] sm:$0xff]
        %v1277 = vld [vmem:[#allocation2 + $0x39] sm:$0xff]
        %v1278 = vld [vmem:[#allocation2 + $0x41] sm:$0xff]
        %s1279 = scalar_lea.vmem [#allocation4], 256
        %v1280 = vld [vmem:[%s1279] sm:$0xff]
        %v1281 = vld [vmem:[%s1279 + $0x8] sm:$0xff]
        %v1282 = vld [vmem:[%s1279 + $0x10] sm:$0xff]
        %v1283 = vld [vmem:[%s1279 + $0x18] sm:$0xff]
        %v1284 = vld [vmem:[%s1279 + $0x20] sm:$0xff]
        %v1285 = vld [vmem:[%s1279 + $0x28] sm:$0xff]
        %v1286 = vld [vmem:[%s1279 + $0x30] sm:$0xff]
        %v1287 = vld [vmem:[%s1279 + $0x38] sm:$0xff]
        %v1288 = vld [vmem:[%s1279 + $0x40] sm:$0xff]
        %v1289 = vld [vmem:[%s1279 + $0x48] sm:$0xff]
        %v1290 = vld [vmem:[%s1279 + $0x50] sm:$0xff]
        %v1291 = vld [vmem:[%s1279 + $0x58] sm:$0xff]
        %v1292 = vld [vmem:[%s1279 + $0x60] sm:$0xff]
        %v1293 = vld [vmem:[%s1279 + $0x68] sm:$0xff]
        %v1294 = vld [vmem:[%s1279 + $0x70] sm:$0xff]
        %v1295 = vld [vmem:[%s1279 + $0x78] sm:$0xff]
        %1296 = vmatpush.msra.mxu0 %v1295
        %1297 = vmatpush.msra.mxu0 %v1294
        %1298 = vmatpush.msra.mxu0 %v1293
        %1299 = vmatpush.msra.mxu0 %v1292
        %1300 = vmatpush.msra.mxu0 %v1291
        %1301 = vmatpush.msra.mxu0 %v1290
        %1302 = vmatpush.msra.mxu0 %v1289
        %1303 = vmatpush.msra.mxu0 %v1288
        %1304 = vmatpush.msra.mxu0 %v1287
        %1305 = vmatpush.msra.mxu0 %v1286
        %1306 = vmatpush.msra.mxu0 %v1285
        %1307 = vmatpush.msra.mxu0 %v1284
        %1308 = vmatpush.msra.mxu0 %v1283
        %1309 = vmatpush.msra.mxu0 %v1282
        %1310 = vmatpush.msra.mxu0 %v1281
        %1311 = vmatpush.msra.mxu0 %v1280
        %1312 = vmatmul.f32.gmra.mxu0 %v1270
        %v1313 = vpop.f32.mrf.mxu0
        %v1314 = vadd.f32 0.0, %v1313
        %1315 = vmatmul.f32.gmra.mxu0 %v1271
        %v1316 = vpop.f32.mrf.mxu0
        %v1317 = vadd.f32 0.0, %v1316
        %1318 = vmatmul.f32.gmra.mxu0 %v1272
        %v1319 = vpop.f32.mrf.mxu0
        %v1320 = vadd.f32 0.0, %v1319
        %1321 = vmatmul.f32.gmra.mxu0 %v1273
        %v1322 = vpop.f32.mrf.mxu0
        %v1323 = vadd.f32 0.0, %v1322
        %1324 = vmatmul.f32.gmra.mxu0 %v1274
        %v1325 = vpop.f32.mrf.mxu0
        %v1326 = vadd.f32 0.0, %v1325
        %1327 = vmatmul.f32.gmra.mxu0 %v1275
        %v1328 = vpop.f32.mrf.mxu0
        %v1329 = vadd.f32 0.0, %v1328
        %1330 = vmatmul.f32.gmra.mxu0 %v1276
        %v1331 = vpop.f32.mrf.mxu0
        %v1332 = vadd.f32 0.0, %v1331
        %1333 = vmatmul.f32.gmra.mxu0 %v1277
        %v1334 = vpop.f32.mrf.mxu0
        %v1335 = vadd.f32 0.0, %v1334
        %1336 = vmatmul.f32.gmra.mxu0 %v1278
        %v1337 = vpop.f32.mrf.mxu0
        %v1338 = vadd.f32 0.0, %v1337
        %1339 = vdwg.mxu0
        %v1340 = vld [vmem:[#allocation3] sm:$0xff]
        %v1341 = vld [vmem:[#allocation3 + $0x8] sm:$0xff]
        %v1342 = vld [vmem:[#allocation3 + $0x10] sm:$0xff]
        %v1343 = vld [vmem:[#allocation3 + $0x18] sm:$0xff]
        %v1344 = vld [vmem:[#allocation3 + $0x20] sm:$0xff]
        %v1345 = vld [vmem:[#allocation3 + $0x28] sm:$0xff]
        %v1346 = vld [vmem:[#allocation3 + $0x30] sm:$0xff]
        %v1347 = vld [vmem:[#allocation3 + $0x38] sm:$0xff]
        %v1348 = vld [vmem:[#allocation3 + $0x40] sm:$0xff]
        %v1349 = vadd.f32 %v1340, %v1314
        %v1350 = vadd.f32 %v1341, %v1317
        %v1351 = vadd.f32 %v1342, %v1320
        %v1352 = vadd.f32 %v1343, %v1323
        %v1353 = vadd.f32 %v1344, %v1326
        %v1354 = vadd.f32 %v1345, %v1329
        %v1355 = vadd.f32 %v1346, %v1332
        %v1356 = vadd.f32 %v1347, %v1335
        %v1357 = vadd.f32 %v1348, %v1338
        %1358 = vst [vmem:[#allocation3] sm:$0xff] %v1349
        %1359 = vst [vmem:[#allocation3 + $0x8] sm:$0xff] %v1350
        %1360 = vst [vmem:[#allocation3 + $0x10] sm:$0xff] %v1351
        %1361 = vst [vmem:[#allocation3 + $0x18] sm:$0xff] %v1352
        %1362 = vst [vmem:[#allocation3 + $0x20] sm:$0xff] %v1353
        %1363 = vst [vmem:[#allocation3 + $0x28] sm:$0xff] %v1354
        %1364 = vst [vmem:[#allocation3 + $0x30] sm:$0xff] %v1355
        %1365 = vst [vmem:[#allocation3 + $0x38] sm:$0xff] %v1356
        %1366 = vst [vmem:[#allocation3 + $0x40] sm:$0xff] %v1357
        %v1367 = vld [vmem:[%s881] sm:$0xff]
        %v1368 = vld [vmem:[%s881 + $0x8] sm:$0xff]
        %v1369 = vld [vmem:[%s881 + $0x10] sm:$0xff]
        %v1370 = vld [vmem:[%s881 + $0x18] sm:$0xff]
        %v1371 = vld [vmem:[%s881 + $0x20] sm:$0xff]
        %v1372 = vld [vmem:[%s881 + $0x28] sm:$0xff]
        %v1373 = vld [vmem:[%s881 + $0x30] sm:$0xff]
        %v1374 = vld [vmem:[%s881 + $0x38] sm:$0xff]
        %v1375 = vld [vmem:[%s881 + $0x40] sm:$0xff]
        %s1376 = scalar_lea.vmem [#allocation4], 384
        %v1377 = vld [vmem:[%s1376] sm:$0xff]
        %v1378 = vld [vmem:[%s1376 + $0x8] sm:$0xff]
        %v1379 = vld [vmem:[%s1376 + $0x10] sm:$0xff]
        %v1380 = vld [vmem:[%s1376 + $0x18] sm:$0xff]
        %v1381 = vld [vmem:[%s1376 + $0x20] sm:$0xff]
        %v1382 = vld [vmem:[%s1376 + $0x28] sm:$0xff]
        %v1383 = vld [vmem:[%s1376 + $0x30] sm:$0xff]
        %v1384 = vld [vmem:[%s1376 + $0x38] sm:$0xff]
        %v1385 = vld [vmem:[%s1376 + $0x40] sm:$0xff]
        %v1386 = vld [vmem:[%s1376 + $0x48] sm:$0xff]
        %v1387 = vld [vmem:[%s1376 + $0x50] sm:$0xff]
        %v1388 = vld [vmem:[%s1376 + $0x58] sm:$0xff]
        %v1389 = vld [vmem:[%s1376 + $0x60] sm:$0xff]
        %v1390 = vld [vmem:[%s1376 + $0x68] sm:$0xff]
        %v1391 = vld [vmem:[%s1376 + $0x70] sm:$0xff]
        %v1392 = vld [vmem:[%s1376 + $0x78] sm:$0xff]
        %1393 = vmatpush.msra.mxu0 %v1392
        %1394 = vmatpush.msra.mxu0 %v1391
        %1395 = vmatpush.msra.mxu0 %v1390
        %1396 = vmatpush.msra.mxu0 %v1389
        %1397 = vmatpush.msra.mxu0 %v1388
        %1398 = vmatpush.msra.mxu0 %v1387
        %1399 = vmatpush.msra.mxu0 %v1386
        %1400 = vmatpush.msra.mxu0 %v1385
        %1401 = vmatpush.msra.mxu0 %v1384
        %1402 = vmatpush.msra.mxu0 %v1383
        %1403 = vmatpush.msra.mxu0 %v1382
        %1404 = vmatpush.msra.mxu0 %v1381
        %1405 = vmatpush.msra.mxu0 %v1380
        %1406 = vmatpush.msra.mxu0 %v1379
        %1407 = vmatpush.msra.mxu0 %v1378
        %1408 = vmatpush.msra.mxu0 %v1377
        %1409 = vmatmul.f32.gmra.mxu0 %v1367
        %v1410 = vpop.f32.mrf.mxu0
        %v1411 = vadd.f32 0.0, %v1410
        %1412 = vmatmul.f32.gmra.mxu0 %v1368
        %v1413 = vpop.f32.mrf.mxu0
        %v1414 = vadd.f32 0.0, %v1413
        %1415 = vmatmul.f32.gmra.mxu0 %v1369
        %v1416 = vpop.f32.mrf.mxu0
        %v1417 = vadd.f32 0.0, %v1416
        %1418 = vmatmul.f32.gmra.mxu0 %v1370
        %v1419 = vpop.f32.mrf.mxu0
        %v1420 = vadd.f32 0.0, %v1419
        %1421 = vmatmul.f32.gmra.mxu0 %v1371
        %v1422 = vpop.f32.mrf.mxu0
        %v1423 = vadd.f32 0.0, %v1422
        %1424 = vmatmul.f32.gmra.mxu0 %v1372
        %v1425 = vpop.f32.mrf.mxu0
        %v1426 = vadd.f32 0.0, %v1425
        %1427 = vmatmul.f32.gmra.mxu0 %v1373
        %v1428 = vpop.f32.mrf.mxu0
        %v1429 = vadd.f32 0.0, %v1428
        %1430 = vmatmul.f32.gmra.mxu0 %v1374
        %v1431 = vpop.f32.mrf.mxu0
        %v1432 = vadd.f32 0.0, %v1431
        %1433 = vmatmul.f32.gmra.mxu0 %v1375
        %v1434 = vpop.f32.mrf.mxu0
        %v1435 = vadd.f32 0.0, %v1434
        %1436 = vdwg.mxu0
        %v1437 = vld [vmem:[#allocation3] sm:$0xff]
        %v1438 = vld [vmem:[#allocation3 + $0x8] sm:$0xff]
        %v1439 = vld [vmem:[#allocation3 + $0x10] sm:$0xff]
        %v1440 = vld [vmem:[#allocation3 + $0x18] sm:$0xff]
        %v1441 = vld [vmem:[#allocation3 + $0x20] sm:$0xff]
        %v1442 = vld [vmem:[#allocation3 + $0x28] sm:$0xff]
        %v1443 = vld [vmem:[#allocation3 + $0x30] sm:$0xff]
        %v1444 = vld [vmem:[#allocation3 + $0x38] sm:$0xff]
        %v1445 = vld [vmem:[#allocation3 + $0x40] sm:$0xff]
        %v1446 = vadd.f32 %v1437, %v1411
        %v1447 = vadd.f32 %v1438, %v1414
        %v1448 = vadd.f32 %v1439, %v1417
        %v1449 = vadd.f32 %v1440, %v1420
        %v1450 = vadd.f32 %v1441, %v1423
        %v1451 = vadd.f32 %v1442, %v1426
        %v1452 = vadd.f32 %v1443, %v1429
        %v1453 = vadd.f32 %v1444, %v1432
        %v1454 = vadd.f32 %v1445, %v1435
        %1455 = vst [vmem:[#allocation3] sm:$0xff] %v1446
        %1456 = vst [vmem:[#allocation3 + $0x8] sm:$0xff] %v1447
        %1457 = vst [vmem:[#allocation3 + $0x10] sm:$0xff] %v1448
        %1458 = vst [vmem:[#allocation3 + $0x18] sm:$0xff] %v1449
        %1459 = vst [vmem:[#allocation3 + $0x20] sm:$0xff] %v1450
        %1460 = vst [vmem:[#allocation3 + $0x28] sm:$0xff] %v1451
        %1461 = vst [vmem:[#allocation3 + $0x30] sm:$0xff] %v1452
        %1462 = vst [vmem:[#allocation3 + $0x38] sm:$0xff] %v1453
        %1463 = vst [vmem:[#allocation3 + $0x40] sm:$0xff] %v1454
        %v1464 = vld [vmem:[%s1083] sm:$0xff]
        %v1465 = vld [vmem:[%s1083 + $0x8] sm:$0xff]
        %v1466 = vld [vmem:[%s1083 + $0x10] sm:$0xff]
        %v1467 = vld [vmem:[%s1083 + $0x18] sm:$0xff]
        %v1468 = vld [vmem:[%s1083 + $0x20] sm:$0xff]
        %v1469 = vld [vmem:[%s1083 + $0x28] sm:$0xff]
        %v1470 = vld [vmem:[%s1083 + $0x30] sm:$0xff]
        %v1471 = vld [vmem:[%s1083 + $0x38] sm:$0xff]
        %v1472 = vld [vmem:[%s1083 + $0x40] sm:$0xff]
        %s1473 = scalar_lea.vmem [#allocation4], 512
        %v1474 = vld [vmem:[%s1473] sm:$0xff]
        %v1475 = vld [vmem:[%s1473 + $0x8] sm:$0xff]
        %v1476 = vld [vmem:[%s1473 + $0x10] sm:$0xff]
        %v1477 = vld [vmem:[%s1473 + $0x18] sm:$0xff]
        %v1478 = vld [vmem:[%s1473 + $0x20] sm:$0xff]
        %v1479 = vld [vmem:[%s1473 + $0x28] sm:$0xff]
        %v1480 = vld [vmem:[%s1473 + $0x30] sm:$0xff]
        %v1481 = vld [vmem:[%s1473 + $0x38] sm:$0xff]
        %v1482 = vld [vmem:[%s1473 + $0x40] sm:$0xff]
        %v1483 = vld [vmem:[%s1473 + $0x48] sm:$0xff]
        %v1484 = vld [vmem:[%s1473 + $0x50] sm:$0xff]
        %v1485 = vld [vmem:[%s1473 + $0x58] sm:$0xff]
        %v1486 = vld [vmem:[%s1473 + $0x60] sm:$0xff]
        %v1487 = vld [vmem:[%s1473 + $0x68] sm:$0xff]
        %v1488 = vld [vmem:[%s1473 + $0x70] sm:$0xff]
        %v1489 = vld [vmem:[%s1473 + $0x78] sm:$0xff]
        %1490 = vmatpush.msra.mxu0 %v1489
        %1491 = vmatpush.msra.mxu0 %v1488
        %1492 = vmatpush.msra.mxu0 %v1487
        %1493 = vmatpush.msra.mxu0 %v1486
        %1494 = vmatpush.msra.mxu0 %v1485
        %1495 = vmatpush.msra.mxu0 %v1484
        %1496 = vmatpush.msra.mxu0 %v1483
        %1497 = vmatpush.msra.mxu0 %v1482
        %1498 = vmatpush.msra.mxu0 %v1481
        %1499 = vmatpush.msra.mxu0 %v1480
        %1500 = vmatpush.msra.mxu0 %v1479
        %1501 = vmatpush.msra.mxu0 %v1478
        %1502 = vmatpush.msra.mxu0 %v1477
        %1503 = vmatpush.msra.mxu0 %v1476
        %1504 = vmatpush.msra.mxu0 %v1475
        %1505 = vmatpush.msra.mxu0 %v1474
        %1506 = vmatmul.f32.gmra.mxu0 %v1464
        %v1507 = vpop.f32.mrf.mxu0
        %v1508 = vadd.f32 0.0, %v1507
        %1509 = vmatmul.f32.gmra.mxu0 %v1465
        %v1510 = vpop.f32.mrf.mxu0
        %v1511 = vadd.f32 0.0, %v1510
        %1512 = vmatmul.f32.gmra.mxu0 %v1466
        %v1513 = vpop.f32.mrf.mxu0
        %v1514 = vadd.f32 0.0, %v1513
        %1515 = vmatmul.f32.gmra.mxu0 %v1467
        %v1516 = vpop.f32.mrf.mxu0
        %v1517 = vadd.f32 0.0, %v1516
        %1518 = vmatmul.f32.gmra.mxu0 %v1468
        %v1519 = vpop.f32.mrf.mxu0
        %v1520 = vadd.f32 0.0, %v1519
        %1521 = vmatmul.f32.gmra.mxu0 %v1469
        %v1522 = vpop.f32.mrf.mxu0
        %v1523 = vadd.f32 0.0, %v1522
        %1524 = vmatmul.f32.gmra.mxu0 %v1470
        %v1525 = vpop.f32.mrf.mxu0
        %v1526 = vadd.f32 0.0, %v1525
        %1527 = vmatmul.f32.gmra.mxu0 %v1471
        %v1528 = vpop.f32.mrf.mxu0
        %v1529 = vadd.f32 0.0, %v1528
        %1530 = vmatmul.f32.gmra.mxu0 %v1472
        %v1531 = vpop.f32.mrf.mxu0
        %v1532 = vadd.f32 0.0, %v1531
        %1533 = vdwg.mxu0
        %v1534 = vld [vmem:[#allocation3] sm:$0xff]
        %v1535 = vld [vmem:[#allocation3 + $0x8] sm:$0xff]
        %v1536 = vld [vmem:[#allocation3 + $0x10] sm:$0xff]
        %v1537 = vld [vmem:[#allocation3 + $0x18] sm:$0xff]
        %v1538 = vld [vmem:[#allocation3 + $0x20] sm:$0xff]
        %v1539 = vld [vmem:[#allocation3 + $0x28] sm:$0xff]
        %v1540 = vld [vmem:[#allocation3 + $0x30] sm:$0xff]
        %v1541 = vld [vmem:[#allocation3 + $0x38] sm:$0xff]
        %v1542 = vld [vmem:[#allocation3 + $0x40] sm:$0xff]
        %v1543 = vadd.f32 %v1534, %v1508
        %v1544 = vadd.f32 %v1535, %v1511
        %v1545 = vadd.f32 %v1536, %v1514
        %v1546 = vadd.f32 %v1537, %v1517
        %v1547 = vadd.f32 %v1538, %v1520
        %v1548 = vadd.f32 %v1539, %v1523
        %v1549 = vadd.f32 %v1540, %v1526
        %v1550 = vadd.f32 %v1541, %v1529
        %v1551 = vadd.f32 %v1542, %v1532
        %1552 = vst [vmem:[#allocation3] sm:$0xff] %v1543
        %1553 = vst [vmem:[#allocation3 + $0x8] sm:$0xff] %v1544
        %1554 = vst [vmem:[#allocation3 + $0x10] sm:$0xff] %v1545
        %1555 = vst [vmem:[#allocation3 + $0x18] sm:$0xff] %v1546
        %1556 = vst [vmem:[#allocation3 + $0x20] sm:$0xff] %v1547
        %1557 = vst [vmem:[#allocation3 + $0x28] sm:$0xff] %v1548
        %1558 = vst [vmem:[#allocation3 + $0x30] sm:$0xff] %v1549
        %1559 = vst [vmem:[#allocation3 + $0x38] sm:$0xff] %v1550
        %1560 = vst [vmem:[#allocation3 + $0x40] sm:$0xff] %v1551
        %v1561 = vld [vmem:[%s881 + $0x1] sm:$0xff]
        %v1562 = vld [vmem:[%s881 + $0x9] sm:$0xff]
        %v1563 = vld [vmem:[%s881 + $0x11] sm:$0xff]
        %v1564 = vld [vmem:[%s881 + $0x19] sm:$0xff]
        %v1565 = vld [vmem:[%s881 + $0x21] sm:$0xff]
        %v1566 = vld [vmem:[%s881 + $0x29] sm:$0xff]
        %v1567 = vld [vmem:[%s881 + $0x31] sm:$0xff]
        %v1568 = vld [vmem:[%s881 + $0x39] sm:$0xff]
        %v1569 = vld [vmem:[%s881 + $0x41] sm:$0xff]
        %s1570 = scalar_lea.vmem [#allocation4], 640
        %v1571 = vld [vmem:[%s1570] sm:$0xff]
        %v1572 = vld [vmem:[%s1570 + $0x8] sm:$0xff]
        %v1573 = vld [vmem:[%s1570 + $0x10] sm:$0xff]
        %v1574 = vld [vmem:[%s1570 + $0x18] sm:$0xff]
        %v1575 = vld [vmem:[%s1570 + $0x20] sm:$0xff]
        %v1576 = vld [vmem:[%s1570 + $0x28] sm:$0xff]
        %v1577 = vld [vmem:[%s1570 + $0x30] sm:$0xff]
        %v1578 = vld [vmem:[%s1570 + $0x38] sm:$0xff]
        %v1579 = vld [vmem:[%s1570 + $0x40] sm:$0xff]
        %v1580 = vld [vmem:[%s1570 + $0x48] sm:$0xff]
        %v1581 = vld [vmem:[%s1570 + $0x50] sm:$0xff]
        %v1582 = vld [vmem:[%s1570 + $0x58] sm:$0xff]
        %v1583 = vld [vmem:[%s1570 + $0x60] sm:$0xff]
        %v1584 = vld [vmem:[%s1570 + $0x68] sm:$0xff]
        %v1585 = vld [vmem:[%s1570 + $0x70] sm:$0xff]
        %v1586 = vld [vmem:[%s1570 + $0x78] sm:$0xff]
        %1587 = vmatpush.msra.mxu0 %v1586
        %1588 = vmatpush.msra.mxu0 %v1585
        %1589 = vmatpush.msra.mxu0 %v1584
        %1590 = vmatpush.msra.mxu0 %v1583
        %1591 = vmatpush.msra.mxu0 %v1582
        %1592 = vmatpush.msra.mxu0 %v1581
        %1593 = vmatpush.msra.mxu0 %v1580
        %1594 = vmatpush.msra.mxu0 %v1579
        %1595 = vmatpush.msra.mxu0 %v1578
        %1596 = vmatpush.msra.mxu0 %v1577
        %1597 = vmatpush.msra.mxu0 %v1576
        %1598 = vmatpush.msra.mxu0 %v1575
        %1599 = vmatpush.msra.mxu0 %v1574
        %1600 = vmatpush.msra.mxu0 %v1573
        %1601 = vmatpush.msra.mxu0 %v1572
        %1602 = vmatpush.msra.mxu0 %v1571
        %1603 = vmatmul.f32.gmra.mxu0 %v1561
        %v1604 = vpop.f32.mrf.mxu0
        %v1605 = vadd.f32 0.0, %v1604
        %1606 = vmatmul.f32.gmra.mxu0 %v1562
        %v1607 = vpop.f32.mrf.mxu0
        %v1608 = vadd.f32 0.0, %v1607
        %1609 = vmatmul.f32.gmra.mxu0 %v1563
        %v1610 = vpop.f32.mrf.mxu0
        %v1611 = vadd.f32 0.0, %v1610
        %1612 = vmatmul.f32.gmra.mxu0 %v1564
        %v1613 = vpop.f32.mrf.mxu0
        %v1614 = vadd.f32 0.0, %v1613
        %1615 = vmatmul.f32.gmra.mxu0 %v1565
        %v1616 = vpop.f32.mrf.mxu0
        %v1617 = vadd.f32 0.0, %v1616
        %1618 = vmatmul.f32.gmra.mxu0 %v1566
        %v1619 = vpop.f32.mrf.mxu0
        %v1620 = vadd.f32 0.0, %v1619
        %1621 = vmatmul.f32.gmra.mxu0 %v1567
        %v1622 = vpop.f32.mrf.mxu0
        %v1623 = vadd.f32 0.0, %v1622
        %1624 = vmatmul.f32.gmra.mxu0 %v1568
        %v1625 = vpop.f32.mrf.mxu0
        %v1626 = vadd.f32 0.0, %v1625
        %1627 = vmatmul.f32.gmra.mxu0 %v1569
        %v1628 = vpop.f32.mrf.mxu0
        %v1629 = vadd.f32 0.0, %v1628
        %1630 = vdwg.mxu0
        %v1631 = vld [vmem:[#allocation3] sm:$0xff]
        %v1632 = vld [vmem:[#allocation3 + $0x8] sm:$0xff]
        %v1633 = vld [vmem:[#allocation3 + $0x10] sm:$0xff]
        %v1634 = vld [vmem:[#allocation3 + $0x18] sm:$0xff]
        %v1635 = vld [vmem:[#allocation3 + $0x20] sm:$0xff]
        %v1636 = vld [vmem:[#allocation3 + $0x28] sm:$0xff]
        %v1637 = vld [vmem:[#allocation3 + $0x30] sm:$0xff]
        %v1638 = vld [vmem:[#allocation3 + $0x38] sm:$0xff]
        %v1639 = vld [vmem:[#allocation3 + $0x40] sm:$0xff]
        %v1640 = vadd.f32 %v1631, %v1605
        %v1641 = vadd.f32 %v1632, %v1608
        %v1642 = vadd.f32 %v1633, %v1611
        %v1643 = vadd.f32 %v1634, %v1614
        %v1644 = vadd.f32 %v1635, %v1617
        %v1645 = vadd.f32 %v1636, %v1620
        %v1646 = vadd.f32 %v1637, %v1623
        %v1647 = vadd.f32 %v1638, %v1626
        %v1648 = vadd.f32 %v1639, %v1629
        %1649 = vst [vmem:[#allocation3] sm:$0xff] %v1640
        %1650 = vst [vmem:[#allocation3 + $0x8] sm:$0xff] %v1641
        %1651 = vst [vmem:[#allocation3 + $0x10] sm:$0xff] %v1642
        %1652 = vst [vmem:[#allocation3 + $0x18] sm:$0xff] %v1643
        %1653 = vst [vmem:[#allocation3 + $0x20] sm:$0xff] %v1644
        %1654 = vst [vmem:[#allocation3 + $0x28] sm:$0xff] %v1645
        %1655 = vst [vmem:[#allocation3 + $0x30] sm:$0xff] %v1646
        %1656 = vst [vmem:[#allocation3 + $0x38] sm:$0xff] %v1647
        %1657 = vst [vmem:[#allocation3 + $0x40] sm:$0xff] %v1648
        %v1658 = vld [vmem:[#allocation2 + $0x9] sm:$0xff]
        %v1659 = vld [vmem:[#allocation2 + $0x11] sm:$0xff]
        %v1660 = vld [vmem:[#allocation2 + $0x19] sm:$0xff]
        %v1661 = vld [vmem:[#allocation2 + $0x21] sm:$0xff]
        %v1662 = vld [vmem:[#allocation2 + $0x29] sm:$0xff]
        %v1663 = vld [vmem:[#allocation2 + $0x31] sm:$0xff]
        %v1664 = vld [vmem:[#allocation2 + $0x39] sm:$0xff]
        %v1665 = vld [vmem:[#allocation2 + $0x41] sm:$0xff]
        %v1666 = vld [vmem:[#allocation2 + $0x49] sm:$0xff]
        %s1667 = scalar_lea.vmem [#allocation4], 768
        %v1668 = vld [vmem:[%s1667] sm:$0xff]
        %v1669 = vld [vmem:[%s1667 + $0x8] sm:$0xff]
        %v1670 = vld [vmem:[%s1667 + $0x10] sm:$0xff]
        %v1671 = vld [vmem:[%s1667 + $0x18] sm:$0xff]
        %v1672 = vld [vmem:[%s1667 + $0x20] sm:$0xff]
        %v1673 = vld [vmem:[%s1667 + $0x28] sm:$0xff]
        %v1674 = vld [vmem:[%s1667 + $0x30] sm:$0xff]
        %v1675 = vld [vmem:[%s1667 + $0x38] sm:$0xff]
        %v1676 = vld [vmem:[%s1667 + $0x40] sm:$0xff]
        %v1677 = vld [vmem:[%s1667 + $0x48] sm:$0xff]
        %v1678 = vld [vmem:[%s1667 + $0x50] sm:$0xff]
        %v1679 = vld [vmem:[%s1667 + $0x58] sm:$0xff]
        %v1680 = vld [vmem:[%s1667 + $0x60] sm:$0xff]
        %v1681 = vld [vmem:[%s1667 + $0x68] sm:$0xff]
        %v1682 = vld [vmem:[%s1667 + $0x70] sm:$0xff]
        %v1683 = vld [vmem:[%s1667 + $0x78] sm:$0xff]
        %1684 = vmatpush.msra.mxu0 %v1683
        %1685 = vmatpush.msra.mxu0 %v1682
        %1686 = vmatpush.msra.mxu0 %v1681
        %1687 = vmatpush.msra.mxu0 %v1680
        %1688 = vmatpush.msra.mxu0 %v1679
        %1689 = vmatpush.msra.mxu0 %v1678
        %1690 = vmatpush.msra.mxu0 %v1677
        %1691 = vmatpush.msra.mxu0 %v1676
        %1692 = vmatpush.msra.mxu0 %v1675
        %1693 = vmatpush.msra.mxu0 %v1674
        %1694 = vmatpush.msra.mxu0 %v1673
        %1695 = vmatpush.msra.mxu0 %v1672
        %1696 = vmatpush.msra.mxu0 %v1671
        %1697 = vmatpush.msra.mxu0 %v1670
        %1698 = vmatpush.msra.mxu0 %v1669
        %1699 = vmatpush.msra.mxu0 %v1668
        %1700 = vmatmul.f32.gmra.mxu0 %v1658
        %v1701 = vpop.f32.mrf.mxu0
        %v1702 = vadd.f32 0.0, %v1701
        %1703 = vmatmul.f32.gmra.mxu0 %v1659
        %v1704 = vpop.f32.mrf.mxu0
        %v1705 = vadd.f32 0.0, %v1704
        %1706 = vmatmul.f32.gmra.mxu0 %v1660
        %v1707 = vpop.f32.mrf.mxu0
        %v1708 = vadd.f32 0.0, %v1707
        %1709 = vmatmul.f32.gmra.mxu0 %v1661
        %v1710 = vpop.f32.mrf.mxu0
        %v1711 = vadd.f32 0.0, %v1710
        %1712 = vmatmul.f32.gmra.mxu0 %v1662
        %v1713 = vpop.f32.mrf.mxu0
        %v1714 = vadd.f32 0.0, %v1713
        %1715 = vmatmul.f32.gmra.mxu0 %v1663
        %v1716 = vpop.f32.mrf.mxu0
        %v1717 = vadd.f32 0.0, %v1716
        %1718 = vmatmul.f32.gmra.mxu0 %v1664
        %v1719 = vpop.f32.mrf.mxu0
        %v1720 = vadd.f32 0.0, %v1719
        %1721 = vmatmul.f32.gmra.mxu0 %v1665
        %v1722 = vpop.f32.mrf.mxu0
        %v1723 = vadd.f32 0.0, %v1722
        %1724 = vmatmul.f32.gmra.mxu0 %v1666
        %v1725 = vpop.f32.mrf.mxu0
        %v1726 = vadd.f32 0.0, %v1725
        %1727 = vdwg.mxu0
        %v1728 = vld [vmem:[#allocation3] sm:$0xff]
        %v1729 = vld [vmem:[#allocation3 + $0x8] sm:$0xff]
        %v1730 = vld [vmem:[#allocation3 + $0x10] sm:$0xff]
        %v1731 = vld [vmem:[#allocation3 + $0x18] sm:$0xff]
        %v1732 = vld [vmem:[#allocation3 + $0x20] sm:$0xff]
        %v1733 = vld [vmem:[#allocation3 + $0x28] sm:$0xff]
        %v1734 = vld [vmem:[#allocation3 + $0x30] sm:$0xff]
        %v1735 = vld [vmem:[#allocation3 + $0x38] sm:$0xff]
        %v1736 = vld [vmem:[#allocation3 + $0x40] sm:$0xff]
        %v1737 = vadd.f32 %v1728, %v1702
        %v1738 = vadd.f32 %v1729, %v1705
        %v1739 = vadd.f32 %v1730, %v1708
        %v1740 = vadd.f32 %v1731, %v1711
        %v1741 = vadd.f32 %v1732, %v1714
        %v1742 = vadd.f32 %v1733, %v1717
        %v1743 = vadd.f32 %v1734, %v1720
        %v1744 = vadd.f32 %v1735, %v1723
        %v1745 = vadd.f32 %v1736, %v1726
        %1746 = vst [vmem:[#allocation3] sm:$0xff] %v1737
        %1747 = vst [vmem:[#allocation3 + $0x8] sm:$0xff] %v1738
        %1748 = vst [vmem:[#allocation3 + $0x10] sm:$0xff] %v1739
        %1749 = vst [vmem:[#allocation3 + $0x18] sm:$0xff] %v1740
        %1750 = vst [vmem:[#allocation3 + $0x20] sm:$0xff] %v1741
        %1751 = vst [vmem:[#allocation3 + $0x28] sm:$0xff] %v1742
        %1752 = vst [vmem:[#allocation3 + $0x30] sm:$0xff] %v1743
        %1753 = vst [vmem:[#allocation3 + $0x38] sm:$0xff] %v1744
        %1754 = vst [vmem:[#allocation3 + $0x40] sm:$0xff] %v1745
        %v1755 = vld [vmem:[%s679 + $0x9] sm:$0xff]
        %v1756 = vld [vmem:[%s679 + $0x11] sm:$0xff]
        %v1757 = vld [vmem:[%s679 + $0x19] sm:$0xff]
        %v1758 = vld [vmem:[%s679 + $0x21] sm:$0xff]
        %v1759 = vld [vmem:[%s679 + $0x29] sm:$0xff]
        %v1760 = vld [vmem:[%s679 + $0x31] sm:$0xff]
        %v1761 = vld [vmem:[%s679 + $0x39] sm:$0xff]
        %v1762 = vld [vmem:[%s679 + $0x41] sm:$0xff]
        %v1763 = vld [vmem:[%s679 + $0x49] sm:$0xff]
        %s1764 = scalar_lea.vmem [#allocation4], 896
        %v1765 = vld [vmem:[%s1764] sm:$0xff]
        %v1766 = vld [vmem:[%s1764 + $0x8] sm:$0xff]
        %v1767 = vld [vmem:[%s1764 + $0x10] sm:$0xff]
        %v1768 = vld [vmem:[%s1764 + $0x18] sm:$0xff]
        %v1769 = vld [vmem:[%s1764 + $0x20] sm:$0xff]
        %v1770 = vld [vmem:[%s1764 + $0x28] sm:$0xff]
        %v1771 = vld [vmem:[%s1764 + $0x30] sm:$0xff]
        %v1772 = vld [vmem:[%s1764 + $0x38] sm:$0xff]
        %v1773 = vld [vmem:[%s1764 + $0x40] sm:$0xff]
        %v1774 = vld [vmem:[%s1764 + $0x48] sm:$0xff]
        %v1775 = vld [vmem:[%s1764 + $0x50] sm:$0xff]
        %v1776 = vld [vmem:[%s1764 + $0x58] sm:$0xff]
        %v1777 = vld [vmem:[%s1764 + $0x60] sm:$0xff]
        %v1778 = vld [vmem:[%s1764 + $0x68] sm:$0xff]
        %v1779 = vld [vmem:[%s1764 + $0x70] sm:$0xff]
        %v1780 = vld [vmem:[%s1764 + $0x78] sm:$0xff]
        %1781 = vmatpush.msra.mxu0 %v1780
        %1782 = vmatpush.msra.mxu0 %v1779
        %1783 = vmatpush.msra.mxu0 %v1778
        %1784 = vmatpush.msra.mxu0 %v1777
        %1785 = vmatpush.msra.mxu0 %v1776
        %1786 = vmatpush.msra.mxu0 %v1775
        %1787 = vmatpush.msra.mxu0 %v1774
        %1788 = vmatpush.msra.mxu0 %v1773
        %1789 = vmatpush.msra.mxu0 %v1772
        %1790 = vmatpush.msra.mxu0 %v1771
        %1791 = vmatpush.msra.mxu0 %v1770
        %1792 = vmatpush.msra.mxu0 %v1769
        %1793 = vmatpush.msra.mxu0 %v1768
        %1794 = vmatpush.msra.mxu0 %v1767
        %1795 = vmatpush.msra.mxu0 %v1766
        %1796 = vmatpush.msra.mxu0 %v1765
        %1797 = vmatmul.f32.gmra.mxu0 %v1755
        %v1798 = vpop.f32.mrf.mxu0
        %v1799 = vadd.f32 0.0, %v1798
        %1800 = vmatmul.f32.gmra.mxu0 %v1756
        %v1801 = vpop.f32.mrf.mxu0
        %v1802 = vadd.f32 0.0, %v1801
        %1803 = vmatmul.f32.gmra.mxu0 %v1757
        %v1804 = vpop.f32.mrf.mxu0
        %v1805 = vadd.f32 0.0, %v1804
        %1806 = vmatmul.f32.gmra.mxu0 %v1758
        %v1807 = vpop.f32.mrf.mxu0
        %v1808 = vadd.f32 0.0, %v1807
        %1809 = vmatmul.f32.gmra.mxu0 %v1759
        %v1810 = vpop.f32.mrf.mxu0
        %v1811 = vadd.f32 0.0, %v1810
        %1812 = vmatmul.f32.gmra.mxu0 %v1760
        %v1813 = vpop.f32.mrf.mxu0
        %v1814 = vadd.f32 0.0, %v1813
        %1815 = vmatmul.f32.gmra.mxu0 %v1761
        %v1816 = vpop.f32.mrf.mxu0
        %v1817 = vadd.f32 0.0, %v1816
        %1818 = vmatmul.f32.gmra.mxu0 %v1762
        %v1819 = vpop.f32.mrf.mxu0
        %v1820 = vadd.f32 0.0, %v1819
        %1821 = vmatmul.f32.gmra.mxu0 %v1763
        %v1822 = vpop.f32.mrf.mxu0
        %v1823 = vadd.f32 0.0, %v1822
        %1824 = vdwg.mxu0
        %v1825 = vld [vmem:[#allocation3] sm:$0xff]
        %v1826 = vld [vmem:[#allocation3 + $0x8] sm:$0xff]
        %v1827 = vld [vmem:[#allocation3 + $0x10] sm:$0xff]
        %v1828 = vld [vmem:[#allocation3 + $0x18] sm:$0xff]
        %v1829 = vld [vmem:[#allocation3 + $0x20] sm:$0xff]
        %v1830 = vld [vmem:[#allocation3 + $0x28] sm:$0xff]
        %v1831 = vld [vmem:[#allocation3 + $0x30] sm:$0xff]
        %v1832 = vld [vmem:[#allocation3 + $0x38] sm:$0xff]
        %v1833 = vld [vmem:[#allocation3 + $0x40] sm:$0xff]
        %v1834 = vadd.f32 %v1825, %v1799
        %v1835 = vadd.f32 %v1826, %v1802
        %v1836 = vadd.f32 %v1827, %v1805
        %v1837 = vadd.f32 %v1828, %v1808
        %v1838 = vadd.f32 %v1829, %v1811
        %v1839 = vadd.f32 %v1830, %v1814
        %v1840 = vadd.f32 %v1831, %v1817
        %v1841 = vadd.f32 %v1832, %v1820
        %v1842 = vadd.f32 %v1833, %v1823
        %1843 = vst [vmem:[#allocation3] sm:$0xff] %v1834
        %1844 = vst [vmem:[#allocation3 + $0x8] sm:$0xff] %v1835
        %1845 = vst [vmem:[#allocation3 + $0x10] sm:$0xff] %v1836
        %1846 = vst [vmem:[#allocation3 + $0x18] sm:$0xff] %v1837
        %1847 = vst [vmem:[#allocation3 + $0x20] sm:$0xff] %v1838
        %1848 = vst [vmem:[#allocation3 + $0x28] sm:$0xff] %v1839
        %1849 = vst [vmem:[#allocation3 + $0x30] sm:$0xff] %v1840
        %1850 = vst [vmem:[#allocation3 + $0x38] sm:$0xff] %v1841
        %1851 = vst [vmem:[#allocation3 + $0x40] sm:$0xff] %v1842
        %v1852 = vld [vmem:[#allocation2 + $0xa] sm:$0xff]
        %v1853 = vld [vmem:[#allocation2 + $0x12] sm:$0xff]
        %v1854 = vld [vmem:[#allocation2 + $0x1a] sm:$0xff]
        %v1855 = vld [vmem:[#allocation2 + $0x22] sm:$0xff]
        %v1856 = vld [vmem:[#allocation2 + $0x2a] sm:$0xff]
        %v1857 = vld [vmem:[#allocation2 + $0x32] sm:$0xff]
        %v1858 = vld [vmem:[#allocation2 + $0x3a] sm:$0xff]
        %v1859 = vld [vmem:[#allocation2 + $0x42] sm:$0xff]
        %v1860 = vld [vmem:[#allocation2 + $0x4a] sm:$0xff]
        %s1861 = scalar_lea.vmem [#allocation4], 1024
        %v1862 = vld [vmem:[%s1861] sm:$0xff]
        %v1863 = vld [vmem:[%s1861 + $0x8] sm:$0xff]
        %v1864 = vld [vmem:[%s1861 + $0x10] sm:$0xff]
        %v1865 = vld [vmem:[%s1861 + $0x18] sm:$0xff]
        %v1866 = vld [vmem:[%s1861 + $0x20] sm:$0xff]
        %v1867 = vld [vmem:[%s1861 + $0x28] sm:$0xff]
        %v1868 = vld [vmem:[%s1861 + $0x30] sm:$0xff]
        %v1869 = vld [vmem:[%s1861 + $0x38] sm:$0xff]
        %v1870 = vld [vmem:[%s1861 + $0x40] sm:$0xff]
        %v1871 = vld [vmem:[%s1861 + $0x48] sm:$0xff]
        %v1872 = vld [vmem:[%s1861 + $0x50] sm:$0xff]
        %v1873 = vld [vmem:[%s1861 + $0x58] sm:$0xff]
        %v1874 = vld [vmem:[%s1861 + $0x60] sm:$0xff]
        %v1875 = vld [vmem:[%s1861 + $0x68] sm:$0xff]
        %v1876 = vld [vmem:[%s1861 + $0x70] sm:$0xff]
        %v1877 = vld [vmem:[%s1861 + $0x78] sm:$0xff]
        %1878 = vmatpush.msra.mxu0 %v1877
        %1879 = vmatpush.msra.mxu0 %v1876
        %1880 = vmatpush.msra.mxu0 %v1875
        %1881 = vmatpush.msra.mxu0 %v1874
        %1882 = vmatpush.msra.mxu0 %v1873
        %1883 = vmatpush.msra.mxu0 %v1872
        %1884 = vmatpush.msra.mxu0 %v1871
        %1885 = vmatpush.msra.mxu0 %v1870
        %1886 = vmatpush.msra.mxu0 %v1869
        %1887 = vmatpush.msra.mxu0 %v1868
        %1888 = vmatpush.msra.mxu0 %v1867
        %1889 = vmatpush.msra.mxu0 %v1866
        %1890 = vmatpush.msra.mxu0 %v1865
        %1891 = vmatpush.msra.mxu0 %v1864
        %1892 = vmatpush.msra.mxu0 %v1863
        %1893 = vmatpush.msra.mxu0 %v1862
        %1894 = vmatmul.f32.gmra.mxu0 %v1852
        %v1895 = vpop.f32.mrf.mxu0
        %v1896 = vadd.f32 0.0, %v1895
        %1897 = vmatmul.f32.gmra.mxu0 %v1853
        %v1898 = vpop.f32.mrf.mxu0
        %v1899 = vadd.f32 0.0, %v1898
        %1900 = vmatmul.f32.gmra.mxu0 %v1854
        %v1901 = vpop.f32.mrf.mxu0
        %v1902 = vadd.f32 0.0, %v1901
        %1903 = vmatmul.f32.gmra.mxu0 %v1855
        %v1904 = vpop.f32.mrf.mxu0
        %v1905 = vadd.f32 0.0, %v1904
        %1906 = vmatmul.f32.gmra.mxu0 %v1856
        %v1907 = vpop.f32.mrf.mxu0
        %v1908 = vadd.f32 0.0, %v1907
        %1909 = vmatmul.f32.gmra.mxu0 %v1857
        %v1910 = vpop.f32.mrf.mxu0
        %v1911 = vadd.f32 0.0, %v1910
        %1912 = vmatmul.f32.gmra.mxu0 %v1858
        %v1913 = vpop.f32.mrf.mxu0
        %v1914 = vadd.f32 0.0, %v1913
        %1915 = vmatmul.f32.gmra.mxu0 %v1859
        %v1916 = vpop.f32.mrf.mxu0
        %v1917 = vadd.f32 0.0, %v1916
        %1918 = vmatmul.f32.gmra.mxu0 %v1860
        %v1919 = vpop.f32.mrf.mxu0
        %v1920 = vadd.f32 0.0, %v1919
        %1921 = vdwg.mxu0
        %v1922 = vld [vmem:[#allocation3] sm:$0xff]
        %v1923 = vld [vmem:[#allocation3 + $0x8] sm:$0xff]
        %v1924 = vld [vmem:[#allocation3 + $0x10] sm:$0xff]
        %v1925 = vld [vmem:[#allocation3 + $0x18] sm:$0xff]
        %v1926 = vld [vmem:[#allocation3 + $0x20] sm:$0xff]
        %v1927 = vld [vmem:[#allocation3 + $0x28] sm:$0xff]
        %v1928 = vld [vmem:[#allocation3 + $0x30] sm:$0xff]
        %v1929 = vld [vmem:[#allocation3 + $0x38] sm:$0xff]
        %v1930 = vld [vmem:[#allocation3 + $0x40] sm:$0xff]
        %v1931 = vadd.f32 %v1922, %v1896
        %v1932 = vadd.f32 %v1923, %v1899
        %v1933 = vadd.f32 %v1924, %v1902
        %v1934 = vadd.f32 %v1925, %v1905
        %v1935 = vadd.f32 %v1926, %v1908
        %v1936 = vadd.f32 %v1927, %v1911
        %v1937 = vadd.f32 %v1928, %v1914
        %v1938 = vadd.f32 %v1929, %v1917
        %v1939 = vadd.f32 %v1930, %v1920
        %1940 = vst [vmem:[#allocation3] sm:$0xff] %v1931
        %1941 = vst [vmem:[#allocation3 + $0x8] sm:$0xff] %v1932
        %1942 = vst [vmem:[#allocation3 + $0x10] sm:$0xff] %v1933
        %1943 = vst [vmem:[#allocation3 + $0x18] sm:$0xff] %v1934
        %1944 = vst [vmem:[#allocation3 + $0x20] sm:$0xff] %v1935
        %1945 = vst [vmem:[#allocation3 + $0x28] sm:$0xff] %v1936
        %1946 = vst [vmem:[#allocation3 + $0x30] sm:$0xff] %v1937
        %1947 = vst [vmem:[#allocation3 + $0x38] sm:$0xff] %v1938
        %1948 = vst [vmem:[#allocation3 + $0x40] sm:$0xff] %v1939
        %v1949 = vld [vmem:[#allocation3] sm:$0xff]
        %v1950 = vld [vmem:[#allocation3 + $0x8] sm:$0xff]
        %v1951 = vld [vmem:[#allocation3 + $0x10] sm:$0xff]
        %v1952 = vld [vmem:[#allocation3 + $0x18] sm:$0xff]
        %v1953 = vld [vmem:[#allocation3 + $0x20] sm:$0xff]
        %v1954 = vld [vmem:[#allocation3 + $0x28] sm:$0xff]
        %v1955 = vld [vmem:[#allocation3 + $0x30] sm:$0xff]
        %v1956 = vld [vmem:[#allocation3 + $0x38] sm:$0xff]
        %v1957 = vld [vmem:[#allocation3 + $0x40] sm:$0xff]
        %v1958 = vld [vmem:[%s5] sm:$0x1]
        %v1960 = vperm.slane %v1958, 0
        %v1962 = vadd.f32 %v1949, %v1960
        %v1963 = vadd.f32 %v1950, %v1960
        %v1964 = vadd.f32 %v1951, %v1960
        %v1965 = vadd.f32 %v1952, %v1960
        %v1966 = vadd.f32 %v1953, %v1960
        %v1967 = vadd.f32 %v1954, %v1960
        %v1968 = vadd.f32 %v1955, %v1960
        %v1969 = vadd.f32 %v1956, %v1960
        %v1970 = vadd.f32 %v1957, %v1960
        %v1971 = vmax.f32 %v1962, 0.0
        %v1972 = vmax.f32 %v1963, 0.0
        %v1973 = vmax.f32 %v1964, 0.0
        %v1974 = vmax.f32 %v1965, 0.0
        %v1975 = vmax.f32 %v1966, 0.0
        %v1976 = vmax.f32 %v1967, 0.0
        %v1977 = vmax.f32 %v1968, 0.0
        %v1978 = vmax.f32 %v1969, 0.0
        %v1979 = vmax.f32 %v1970, 0.0
        %1980 = vst [vmem:[%s278] sm:$0xff] %v1971
        %1981 = vst [vmem:[%s278 + $0x8] sm:$0xff] %v1972
        %1982 = vst [vmem:[%s278 + $0x10] sm:$0xff] %v1973
        %1983 = vst [vmem:[%s278 + $0x18] sm:$0xff] %v1974
        %1984 = vst [vmem:[%s278 + $0x20] sm:$0xff] %v1975
        %1985 = vst [vmem:[%s278 + $0x28] sm:$0xff] %v1976
        %1986 = vst [vmem:[%s278 + $0x30] sm:$0xff] %v1977
        %1987 = vst [vmem:[%s278 + $0x38] sm:$0xff] %v1978
        %1988 = vst [vmem:[%s278 + $0x40] sm:$0xff] %v1979
        %s1989 = sand.u32 %s174, 1
        %s1990 = scalar_lea.sflag [#allocation6], %s1989
        %s1991 = sand.u32 %s174, 1
        %s1992 = smul.addr %s1991, 72
        %s1993 = scalar_lea.vmem [#allocation7], %s1992
        // Predicated region
        $region49: #{tpu_custom_call.1} parent=43 // pred_check
          %p1994 = pneg %p184
        $region50: #{tpu_custom_call.1} parent=43 // pred_check_branch
          %1996 = sbr.rel (%p1994) target = $region52
        $region51: #{tpu_custom_call.1} parent=43 // pred_region
          %s1997 = smul.u32 9, %s26
          %1999 = vsyncadd %s1990, 0
          %s2000 = smul.addr %s25, 9
          %s2001 = sadd.s32 %s1997, %s2000
          %s2002 = smul.addr %s2001, 8
          %s2003 = scalar_lea.hbm %s6, %s2002
          %s2004 = sshll.u32 %s1993, 4
          %s2005 = int_to_ptr.vmem [resolvable:$true] %s2004
          %s2006 = sshll.u32 %s2003, 4
          %s2007 = int_to_ptr.hbm [resolvable:$true] %s2006
          %2012 = dma.vmem_to_hbm [thread:$0]  %s2005, 1152, %s2007, %s1990, 128, 128, 8
        $region52: #{tpu_custom_call.1} parent=43 // pred_fallthru
          _
      $region44: #{tpu_custom_call.1} parent=5 // pred_fallthru
        _
      %p2013 = scmp.le.s32.totalorder 2, %s16
      // Predicated region
      $region53: #{tpu_custom_call.1} parent=5 // pred_check
        %p2014 = pneg %p2013
      $region54: #{tpu_custom_call.1} parent=5 // pred_check_branch
        %2016 = sbr.rel (%p2014) target = $region56
      $region55: #{tpu_custom_call.1} parent=5 // pred_region
        %s2017 = ssub.s32 %s16, 2
        // Predicated region
        $region57: #{tpu_custom_call.1} parent=55 // pred_check
          %p2018 = pneg %p190
        $region58: #{tpu_custom_call.1} parent=55 // pred_check_branch
          %2020 = sbr.rel (%p2018) target = $region60
        $region59: #{tpu_custom_call.1} parent=55 // pred_region
          %s2021 = sand.u32 %s175, 1
          %s2022 = scalar_lea.sflag [#allocation6], %s2021
          %s2023 = sand.u32 %s175, 1
          %s2024 = smul.addr %s2023, 72
          %s2025 = scalar_lea.vmem [#allocation7], %s2024
          %2027 = dma.done %s2022, 1152
        $region60: #{tpu_custom_call.1} parent=55 // pred_fallthru
          _
      $region56: #{tpu_custom_call.1} parent=5 // pred_fallthru
        _
    $region6: #{tpu_custom_call.1} parent=1 // loop_footer
      %s20 = sadd.s32 1, %s16
    $region7: #{tpu_custom_call.1} parent=1 // loop_footer_branch
      %15 = sbr.rel target = $region3
    $region8: #{tpu_custom_call.1} parent=1 // loop_exit
      _
    %2028 = vsyncpa [#allocation5], 1
    %s2029 = scalar_lea.sflag [#allocation5], 1
    %2030 = vsyncpa %s2029, 1
    %2031 = vsyncpa [#allocation6], 1
    %s2032 = scalar_lea.sflag [#allocation6], 1
    %2033 = vsyncpa %s2032, 1

</llo_original>
